<compile_context>
chip_gen: v6e
topology: v6e:2x2x1
jax: 0.10.0
libtpu: 0.0.40
codegen_flags: <defaults>
</compile_context>

<pallas_src>
import math

import jax
import jax.numpy as jnp
from jax.experimental import pallas as pl
from jax.experimental.pallas import tpu as pltpu

B, S, D, H, DFF = 2, 8, 32, 4, 64            # batch, seq, d_model, heads, d_ff
DK = D // H
EPS = 1e-6
NEG_INF = -1e9

# row offsets inside the packed (PACKD_ROWS, D) slab — every sub-array starts on
# an 8-row (sublane) boundary so all static slices are aligned.
_WO0 = 0                      # Wo: D rows
_W20 = D                      # W2: DFF rows
_BO = D + DFF                 # 96 (multiple of 8)
_B2 = _BO + 8
_LN1A = _BO + 16
_LN1B = _BO + 24
_LN2A = _BO + 32
_LN2B = _BO + 40
PACKD_ROWS = D + DFF + 48


def _layernorm(x, a, b):
    # torch.std default is unbiased (N-1); eps is added to std (not var).
    # Exact division (no approx reciprocal) on the LN path.
    mean = jnp.mean(x, axis=-1, keepdims=True)
    var = jnp.sum((x - mean) ** 2, axis=-1, keepdims=True) * (1.0 / (x.shape[-1] - 1))
    return a * (x - mean) / (jnp.sqrt(var) + EPS) + b


def encoder_layer_kernel(x_ref, mask_ref, wqkvb_ref, w1b_ref, packd_ref, out_ref):
    x = x_ref[0]                            # (S, D): one batch element per grid step
    mask = mask_ref[0]                      # (1, S), 1.0 = keep

    # ---- unpack fused parameter slabs (static, sublane-aligned VMEM slices) ----
    wqkv = wqkvb_ref[:D, :]                 # (D, 3D)
    bqkv = wqkvb_ref[D:D + 1, :]            # (1, 3D)
    w1 = w1b_ref[:D, :]                     # (D, DFF)
    b1 = w1b_ref[D:D + 1, :]                # (1, DFF)
    w2 = packd_ref[_W20:_W20 + DFF, :]      # (DFF, D)
    bo = packd_ref[_BO:_BO + 1, :]          # (1, D)
    b2 = packd_ref[_B2:_B2 + 1, :]
    ln1a = packd_ref[_LN1A:_LN1A + 1, :]
    ln1b = packd_ref[_LN1B:_LN1B + 1, :]
    ln2a = packd_ref[_LN2A:_LN2A + 1, :]
    ln2b = packd_ref[_LN2B:_LN2B + 1, :]
    # Wo viewed per head (H, DK, D): aligned 8-row slices stacked on a major axis.
    wo_h = jnp.stack(
        [packd_ref[_WO0 + h * DK:_WO0 + (h + 1) * DK, :] for h in range(H)], axis=0)

    # ---- sublayer 0: x + self_attn(LN(x), mask)   (dropout == identity) ----
    y = _layernorm(x, ln1a, ln1b)
    # fused QKV: one wide MXU pass (N = 3*D) instead of three narrow ones
    qkv = jnp.dot(y, wqkv, preferred_element_type=jnp.float32) + bqkv       # (S, 3D)

    # head-batched attention (single softmax, batched einsums)
    def split_heads(base):                  # -> (H, S, DK)
        return jnp.stack([qkv[:, base + h * DK: base + (h + 1) * DK]
                          for h in range(H)], axis=0)
    qh, kh, vh = split_heads(0), split_heads(D), split_heads(2 * D)

    scale = 1.0 / math.sqrt(DK)
    s = jnp.einsum("hqd,hkd->hqk", qh, kh,
                   preferred_element_type=jnp.float32) * scale              # (H, S, S)
    # key-padding mask, exactly like the reference (masked scores set to -1e9)
    s = jnp.where((mask != 0.0)[None, :, :], s, NEG_INF)
    s = s - jnp.max(s, axis=-1, keepdims=True)
    p = jnp.exp(s)                                                          # one EUP pass
    p = p * pl.reciprocal(jnp.sum(p, axis=-1, keepdims=True), approx=True)
    o = jnp.einsum("hqk,hkd->hqd", p, vh,
                   preferred_element_type=jnp.float32)                      # (H, S, DK)
    # concat_h(o_h) @ Wo  ==  sum_h o_h @ Wo[h]   (head-batched, then reduce)
    attn = jnp.sum(jnp.einsum("hqd,hdn->hqn", o, wo_h,
                              preferred_element_type=jnp.float32), axis=0)  # (S, D)
    x = x + attn + bo

    # ---- sublayer 1: x + FFN(LN(x)) ----
    y = _layernorm(x, ln2a, ln2b)
    h1 = jnp.maximum(jnp.dot(y, w1, preferred_element_type=jnp.float32) + b1, 0.0)
    out_ref[0] = x + jnp.dot(h1, w2, preferred_element_type=jnp.float32) + b2


def make_params(key):
    ks = jax.random.split(key, 12)
    init = lambda k, shape: (0.02 * jax.random.normal(k, shape)).astype(jnp.float32)
    # weights stored as (in, out) so the kernel does y @ W + b
    return dict(
        wq=init(ks[0], (D, D)), bq=init(ks[1], (1, D)),
        wk=init(ks[2], (D, D)), bk=init(ks[3], (1, D)),
        wv=init(ks[4], (D, D)), bv=init(ks[5], (1, D)),
        wo=init(ks[6], (D, D)), bo=init(ks[7], (1, D)),
        w1=init(ks[8], (D, DFF)), b1=init(ks[9], (1, DFF)),
        w2=init(ks[10], (DFF, D)), b2=init(ks[11], (1, D)),
        ln1a=jnp.ones((1, D), jnp.float32), ln1b=jnp.zeros((1, D), jnp.float32),
        ln2a=jnp.ones((1, D), jnp.float32), ln2b=jnp.zeros((1, D), jnp.float32),
    )


def pack_params(p):
    """Pack 16 small parameter arrays into 3 fused slabs (fewer, larger DMAs).
    Each (1, D) vector is padded to 8 rows so every in-kernel slice starts on a
    sublane boundary."""
    pad8 = lambda v: jnp.concatenate([v, jnp.zeros((7, v.shape[1]), v.dtype)], axis=0)
    wqkvb = jnp.concatenate(
        [jnp.concatenate([p["wq"], p["wk"], p["wv"]], axis=1),
         jnp.concatenate([p["bq"], p["bk"], p["bv"]], axis=1)], axis=0)      # (D+1, 3D)
    w1b = jnp.concatenate([p["w1"], p["b1"]], axis=0)                        # (D+1, DFF)
    packd = jnp.concatenate(
        [p["wo"], p["w2"]] +
        [pad8(p[n]) for n in ("bo", "b2", "ln1a", "ln1b", "ln2a", "ln2b")],
        axis=0)                                                              # (PACKD_ROWS, D)
    return wqkvb, w1b, packd


def encoder_layer(x, mask, wqkvb, w1b, packd):
    maskf = mask.astype(jnp.float32)        # (B, 1, S)

    flops = B * (2 * S * D * 3 * D                 # fused QKV
                 + 4 * H * S * S * DK              # scores + attn@V
                 + 2 * H * S * DK * D              # head-batched output projection
                 + 4 * S * D * DFF)                # FFN
    cost = pl.CostEstimate(
        flops=flops,
        transcendentals=B * (H * S * S + 4 * S),
        bytes_accessed=4 * (2 * B * S * D + B * S
                            + wqkvb.size + w1b.size + packd.size),
    )

    const2d = lambda b: (0, 0)              # weight slabs: fetched once, never re-DMA'd
    out = pl.pallas_call(
        encoder_layer_kernel,
        out_shape=jax.ShapeDtypeStruct((B, S, D), jnp.float32),
        grid_spec=pltpu.PrefetchScalarGridSpec(
            num_scalar_prefetch=0,
            grid=(B,),                      # one batch element per grid step
            in_specs=[
                pl.BlockSpec((1, S, D), lambda b: (b, 0, 0)),
                pl.BlockSpec((1, 1, S), lambda b: (b, 0, 0)),
                pl.BlockSpec(wqkvb.shape, const2d),
                pl.BlockSpec(w1b.shape, const2d),
                pl.BlockSpec(packd.shape, const2d),
            ],
            out_specs=pl.BlockSpec((1, S, D), lambda b: (b, 0, 0)),
        ),
        compiler_params=pltpu.CompilerParams(
            dimension_semantics=("parallel",)),   # batch axis shards across v7x's 2 TCs
        cost_estimate=cost,
    )(x, maskf, wqkvb, w1b, packd)
    return out


def reference(x, mask, p):
    """Pure-JAX mirror of the PyTorch forward (eval mode) for verification."""
    def ln(x, a, b):
        mean = jnp.mean(x, -1, keepdims=True)
        var = jnp.sum((x - mean) ** 2, -1, keepdims=True) / (x.shape[-1] - 1)
        return a * (x - mean) / (jnp.sqrt(var) + EPS) + b

    y = ln(x, p["ln1a"], p["ln1b"])
    q = y @ p["wq"] + p["bq"]
    k = y @ p["wk"] + p["bk"]
    v = y @ p["wv"] + p["bv"]
    qh = q.reshape(B, S, H, DK).transpose(0, 2, 1, 3)
    kh = k.reshape(B, S, H, DK).transpose(0, 2, 1, 3)
    vh = v.reshape(B, S, H, DK).transpose(0, 2, 1, 3)
    scores = jnp.einsum("bhqd,bhkd->bhqk", qh, kh) / jnp.sqrt(jnp.float32(DK))
    scores = jnp.where(mask[:, None, :, :] == 0.0, NEG_INF, scores)
    p_att = jax.nn.softmax(scores, axis=-1)
    o = jnp.einsum("bhqk,bhkd->bhqd", p_att, vh).transpose(0, 2, 1, 3).reshape(B, S, D)
    x = x + (o @ p["wo"] + p["bo"])
    y = ln(x, p["ln2a"], p["ln2b"])
    return x + (jnp.maximum(y @ p["w1"] + p["b1"], 0.0) @ p["w2"] + p["b2"])


if __name__ == "__main__":
    key = jax.random.PRNGKey(0)
    kx, kp = jax.random.split(key)
    x = jax.random.normal(kx, (B, S, D), dtype=jnp.float32)
    mask = jnp.ones((B, 1, S), dtype=jnp.float32)
    params = make_params(kp)
    wqkvb, w1b, packd = pack_params(params)

    out = encoder_layer(x, mask, wqkvb, w1b, packd)
    jax.block_until_ready(out)

    ref = reference(x, mask, params)
    # tolerance 1e-3: the only approximate op left is pl.reciprocal(approx=True)
    # in the softmax denominator (~2^-12 relative error on sub-terms that are a
    # small fraction of the O(1) output); LayerNorm now uses exact division.
    assert jnp.allclose(out, ref, atol=1e-3, rtol=1e-3), float(jnp.max(jnp.abs(out - ref)))
    print("KERNEL_OK")
</pallas_src>

<mosaic_0001>
module attributes {stable_mosaic.version = 11 : i64} {
  func.func @encoder_layer_kernel(%arg0: i32, %arg1: memref<1x8x32xf32, #tpu.memory_space<vmem>>, %arg2: memref<1x1x8xf32, #tpu.memory_space<vmem>>, %arg3: memref<33x96xf32, #tpu.memory_space<vmem>>, %arg4: memref<33x64xf32, #tpu.memory_space<vmem>>, %arg5: memref<144x32xf32, #tpu.memory_space<vmem>>, %arg6: memref<1x8x32xf32, #tpu.memory_space<vmem>>) attributes {dimension_semantics = [#tpu.dimension_semantics<parallel>], iteration_bounds = array<i64: 2>, scalar_prefetch = 0 : i64, scratch_operands = 0 : i64, tpu.core_type = #tpu.core_type<tc>, window_params = [{transform_indices = @transform_0, window_bounds = array<i64: 1, 8, 32>}, {transform_indices = @transform_1, window_bounds = array<i64: 1, 1, 8>}, {pipeline_mode = #tpu.pipeline_mode<synchronous>, transform_indices = @transform_2, window_bounds = array<i64: 33, 96>}, {pipeline_mode = #tpu.pipeline_mode<synchronous>, transform_indices = @transform_3, window_bounds = array<i64: 33, 64>}, {pipeline_mode = #tpu.pipeline_mode<synchronous>, transform_indices = @transform_4, window_bounds = array<i64: 144, 32>}, {transform_indices = @transform_5, window_bounds = array<i64: 1, 8, 32>}]} {
    %c0 = arith.constant 0 : index
    %c0_0 = arith.constant 0 : index
    %c0_1 = arith.constant 0 : index
    %0 = vector.load %arg1[%c0, %c0_0, %c0_1] : memref<1x8x32xf32, #tpu.memory_space<vmem>>, vector<1x8x32xf32>
    %1 = vector.shape_cast %0 : vector<1x8x32xf32> to vector<8x32xf32>
    %c0_2 = arith.constant 0 : index
    %c0_3 = arith.constant 0 : index
    %c0_4 = arith.constant 0 : index
    %2 = vector.load %arg2[%c0_2, %c0_3, %c0_4] : memref<1x1x8xf32, #tpu.memory_space<vmem>>, vector<1x1x8xf32>
    %3 = vector.shape_cast %2 : vector<1x1x8xf32> to vector<1x8xf32>
    %c0_5 = arith.constant 0 : index
    %c0_6 = arith.constant 0 : index
    %4 = vector.load %arg3[%c0_5, %c0_6] : memref<33x96xf32, #tpu.memory_space<vmem>>, vector<32x96xf32>
    %c32 = arith.constant 32 : index
    %c0_7 = arith.constant 0 : index
    %5 = vector.load %arg3[%c32, %c0_7] : memref<33x96xf32, #tpu.memory_space<vmem>>, vector<1x96xf32>
    %c0_8 = arith.constant 0 : index
    %c0_9 = arith.constant 0 : index
    %6 = vector.load %arg4[%c0_8, %c0_9] : memref<33x64xf32, #tpu.memory_space<vmem>>, vector<32x64xf32>
    %c32_10 = arith.constant 32 : index
    %c0_11 = arith.constant 0 : index
    %7 = vector.load %arg4[%c32_10, %c0_11] : memref<33x64xf32, #tpu.memory_space<vmem>>, vector<1x64xf32>
    %c32_12 = arith.constant 32 : index
    %c0_13 = arith.constant 0 : index
    %8 = vector.load %arg5[%c32_12, %c0_13] : memref<144x32xf32, #tpu.memory_space<vmem>>, vector<64x32xf32>
    %c96 = arith.constant 96 : index
    %c0_14 = arith.constant 0 : index
    %9 = vector.load %arg5[%c96, %c0_14] : memref<144x32xf32, #tpu.memory_space<vmem>>, vector<1x32xf32>
    %c104 = arith.constant 104 : index
    %c0_15 = arith.constant 0 : index
    %10 = vector.load %arg5[%c104, %c0_15] : memref<144x32xf32, #tpu.memory_space<vmem>>, vector<1x32xf32>
    %c112 = arith.constant 112 : index
    %c0_16 = arith.constant 0 : index
    %11 = vector.load %arg5[%c112, %c0_16] : memref<144x32xf32, #tpu.memory_space<vmem>>, vector<1x32xf32>
    %c120 = arith.constant 120 : index
    %c0_17 = arith.constant 0 : index
    %12 = vector.load %arg5[%c120, %c0_17] : memref<144x32xf32, #tpu.memory_space<vmem>>, vector<1x32xf32>
    %c128 = arith.constant 128 : index
    %c0_18 = arith.constant 0 : index
    %13 = vector.load %arg5[%c128, %c0_18] : memref<144x32xf32, #tpu.memory_space<vmem>>, vector<1x32xf32>
    %c136 = arith.constant 136 : index
    %c0_19 = arith.constant 0 : index
    %14 = vector.load %arg5[%c136, %c0_19] : memref<144x32xf32, #tpu.memory_space<vmem>>, vector<1x32xf32>
    %c0_20 = arith.constant 0 : index
    %c0_21 = arith.constant 0 : index
    %15 = vector.load %arg5[%c0_20, %c0_21] : memref<144x32xf32, #tpu.memory_space<vmem>>, vector<8x32xf32>
    %c8 = arith.constant 8 : index
    %c0_22 = arith.constant 0 : index
    %16 = vector.load %arg5[%c8, %c0_22] : memref<144x32xf32, #tpu.memory_space<vmem>>, vector<8x32xf32>
    %c16 = arith.constant 16 : index
    %c0_23 = arith.constant 0 : index
    %17 = vector.load %arg5[%c16, %c0_23] : memref<144x32xf32, #tpu.memory_space<vmem>>, vector<8x32xf32>
    %c24 = arith.constant 24 : index
    %c0_24 = arith.constant 0 : index
    %18 = vector.load %arg5[%c24, %c0_24] : memref<144x32xf32, #tpu.memory_space<vmem>>, vector<8x32xf32>
    %19 = vector.shape_cast %15 : vector<8x32xf32> to vector<1x8x32xf32>
    %20 = vector.shape_cast %16 : vector<8x32xf32> to vector<1x8x32xf32>
    %21 = vector.shape_cast %17 : vector<8x32xf32> to vector<1x8x32xf32>
    %22 = vector.shape_cast %18 : vector<8x32xf32> to vector<1x8x32xf32>
    %23 = tpu.concatenate %19, %20, %21, %22 in 0 : vector<1x8x32xf32>, vector<1x8x32xf32>, vector<1x8x32xf32>, vector<1x8x32xf32> -> vector<4x8x32xf32>
    %cst = arith.constant dense<0.000000e+00> : vector<8xf32>
    %24 = vector.multi_reduction <add>, %1, %cst [1] : vector<8x32xf32> to vector<8xf32>
    %25 = vector.shape_cast %24 : vector<8xf32> to vector<8x1xf32>
    %cst_25 = arith.constant 3.200000e+01 : f32
    %26 = vector.broadcast %cst_25 : f32 to vector<8x1xf32>
    %27 = arith.divf %25, %26 : vector<8x1xf32>
    %28 = vector.broadcast %27 : vector<8x1xf32> to vector<8x32xf32>
    %29 = arith.subf %1, %28 : vector<8x32xf32>
    %30 = arith.mulf %29, %29 : vector<8x32xf32>
    %cst_26 = arith.constant dense<0.000000e+00> : vector<8xf32>
    %31 = vector.multi_reduction <add>, %30, %cst_26 [1] : vector<8x32xf32> to vector<8xf32>
    %32 = vector.shape_cast %31 : vector<8xf32> to vector<8x1xf32>
    %cst_27 = arith.constant 0.0322580636 : f32
    %33 = vector.broadcast %cst_27 : f32 to vector<8x1xf32>
    %34 = arith.mulf %32, %33 : vector<8x1xf32>
    %35 = vector.broadcast %27 : vector<8x1xf32> to vector<8x32xf32>
    %36 = arith.subf %1, %35 : vector<8x32xf32>
    %37 = vector.broadcast %11 : vector<1x32xf32> to vector<8x32xf32>
    %38 = arith.mulf %37, %36 : vector<8x32xf32>
    %39 = math.sqrt %34 : vector<8x1xf32>
    %cst_28 = arith.constant 9.99999997E-7 : f32
    %40 = vector.broadcast %cst_28 : f32 to vector<8x1xf32>
    %41 = arith.addf %39, %40 : vector<8x1xf32>
    %42 = vector.broadcast %41 : vector<8x1xf32> to vector<8x32xf32>
    %43 = arith.divf %38, %42 : vector<8x32xf32>
    %44 = vector.broadcast %12 : vector<1x32xf32> to vector<8x32xf32>
    %45 = arith.addf %43, %44 : vector<8x32xf32>
    %cst_29 = arith.constant dense<0.000000e+00> : vector<8x96xf32>
    %46 = tpu.matmul %45, %4, %cst_29 {dimension_numbers = #tpu.dot_dimension_numbers<[1], [0], [0], [1], [0, 0, 1, 1], [], []>} : vector<8x32xf32>, vector<32x96xf32>, vector<8x96xf32> -> vector<8x96xf32>
    %47 = vector.broadcast %5 : vector<1x96xf32> to vector<8x96xf32>
    %48 = arith.addf %46, %47 : vector<8x96xf32>
    %49 = vector.extract_strided_slice %48 {offsets = [0, 0], sizes = [8, 8], strides = [1, 1]} : vector<8x96xf32> to vector<8x8xf32>
    %50 = vector.extract_strided_slice %48 {offsets = [0, 8], sizes = [8, 8], strides = [1, 1]} : vector<8x96xf32> to vector<8x8xf32>
    %51 = vector.extract_strided_slice %48 {offsets = [0, 16], sizes = [8, 8], strides = [1, 1]} : vector<8x96xf32> to vector<8x8xf32>
    %52 = vector.extract_strided_slice %48 {offsets = [0, 24], sizes = [8, 8], strides = [1, 1]} : vector<8x96xf32> to vector<8x8xf32>
    %53 = vector.shape_cast %49 : vector<8x8xf32> to vector<1x8x8xf32>
    %54 = vector.shape_cast %50 : vector<8x8xf32> to vector<1x8x8xf32>
    %55 = vector.shape_cast %51 : vector<8x8xf32> to vector<1x8x8xf32>
    %56 = vector.shape_cast %52 : vector<8x8xf32> to vector<1x8x8xf32>
    %57 = tpu.concatenate %53, %54, %55, %56 in 0 : vector<1x8x8xf32>, vector<1x8x8xf32>, vector<1x8x8xf32>, vector<1x8x8xf32> -> vector<4x8x8xf32>
    %58 = vector.extract_strided_slice %48 {offsets = [0, 32], sizes = [8, 8], strides = [1, 1]} : vector<8x96xf32> to vector<8x8xf32>
    %59 = vector.extract_strided_slice %48 {offsets = [0, 40], sizes = [8, 8], strides = [1, 1]} : vector<8x96xf32> to vector<8x8xf32>
    %60 = vector.extract_strided_slice %48 {offsets = [0, 48], sizes = [8, 8], strides = [1, 1]} : vector<8x96xf32> to vector<8x8xf32>
    %61 = vector.extract_strided_slice %48 {offsets = [0, 56], sizes = [8, 8], strides = [1, 1]} : vector<8x96xf32> to vector<8x8xf32>
    %62 = vector.shape_cast %58 : vector<8x8xf32> to vector<1x8x8xf32>
    %63 = vector.shape_cast %59 : vector<8x8xf32> to vector<1x8x8xf32>
    %64 = vector.shape_cast %60 : vector<8x8xf32> to vector<1x8x8xf32>
    %65 = vector.shape_cast %61 : vector<8x8xf32> to vector<1x8x8xf32>
    %66 = tpu.concatenate %62, %63, %64, %65 in 0 : vector<1x8x8xf32>, vector<1x8x8xf32>, vector<1x8x8xf32>, vector<1x8x8xf32> -> vector<4x8x8xf32>
    %67 = vector.extract_strided_slice %48 {offsets = [0, 64], sizes = [8, 8], strides = [1, 1]} : vector<8x96xf32> to vector<8x8xf32>
    %68 = vector.extract_strided_slice %48 {offsets = [0, 72], sizes = [8, 8], strides = [1, 1]} : vector<8x96xf32> to vector<8x8xf32>
    %69 = vector.extract_strided_slice %48 {offsets = [0, 80], sizes = [8, 8], strides = [1, 1]} : vector<8x96xf32> to vector<8x8xf32>
    %70 = vector.extract_strided_slice %48 {offsets = [0, 88], sizes = [8, 8], strides = [1, 1]} : vector<8x96xf32> to vector<8x8xf32>
    %71 = vector.shape_cast %67 : vector<8x8xf32> to vector<1x8x8xf32>
    %72 = vector.shape_cast %68 : vector<8x8xf32> to vector<1x8x8xf32>
    %73 = vector.shape_cast %69 : vector<8x8xf32> to vector<1x8x8xf32>
    %74 = vector.shape_cast %70 : vector<8x8xf32> to vector<1x8x8xf32>
    %75 = tpu.concatenate %71, %72, %73, %74 in 0 : vector<1x8x8xf32>, vector<1x8x8xf32>, vector<1x8x8xf32>, vector<1x8x8xf32> -> vector<4x8x8xf32>
    "tpu.trace_start"() <{level = 10 : i32, message = "hqd,hkd->hqk"}> : () -> ()
    %cst_30 = arith.constant dense<0.000000e+00> : vector<4x8x8xf32>
    %76 = tpu.matmul %57, %66, %cst_30 {dimension_numbers = #tpu.dot_dimension_numbers<[2], [2], [1], [1], [0, 0, 0, 1, 1, 1], [0], [0]>} : vector<4x8x8xf32>, vector<4x8x8xf32>, vector<4x8x8xf32> -> vector<4x8x8xf32>
    "tpu.trace_stop"() : () -> ()
    %cst_31 = arith.constant 0.353553385 : f32
    %77 = vector.broadcast %cst_31 : f32 to vector<4x8x8xf32>
    %78 = arith.mulf %76, %77 : vector<4x8x8xf32>
    %cst_32 = arith.constant 0.000000e+00 : f32
    %79 = vector.broadcast %cst_32 : f32 to vector<1x8xf32>
    %80 = arith.cmpf one, %3, %79 : vector<1x8xf32>
    %81 = vector.shape_cast %80 : vector<1x8xi1> to vector<1x1x8xi1>
    %cst_33 = arith.constant -1.000000e+09 : f32
    %82 = vector.shape_cast %81 : vector<1x1x8xi1> to vector<1x1x8xi1>
    %83 = vector.broadcast %82 : vector<1x1x8xi1> to vector<4x8x8xi1>
    %84 = vector.broadcast %cst_33 : f32 to vector<4x8x8xf32>
    %85 = arith.select %83, %78, %84 : vector<4x8x8xi1>, vector<4x8x8xf32>
    %cst_34 = arith.constant dense<0xFF800000> : vector<4x8xf32>
    %86 = vector.multi_reduction <maximumf>, %85, %cst_34 [2] : vector<4x8x8xf32> to vector<4x8xf32>
    %87 = vector.shape_cast %86 : vector<4x8xf32> to vector<4x8x1xf32>
    %88 = vector.broadcast %87 : vector<4x8x1xf32> to vector<4x8x8xf32>
    %89 = arith.subf %85, %88 : vector<4x8x8xf32>
    %90 = math.exp %89 : vector<4x8x8xf32>
    %cst_35 = arith.constant dense<0.000000e+00> : vector<4x8xf32>
    %91 = vector.multi_reduction <add>, %90, %cst_35 [2] : vector<4x8x8xf32> to vector<4x8xf32>
    %92 = vector.shape_cast %91 : vector<4x8xf32> to vector<4x8x1xf32>
    %93 = tpu.reciprocal %92 {approx = true} : vector<4x8x1xf32> -> vector<4x8x1xf32>
    %94 = vector.broadcast %93 : vector<4x8x1xf32> to vector<4x8x8xf32>
    %95 = arith.mulf %90, %94 : vector<4x8x8xf32>
    "tpu.trace_start"() <{level = 10 : i32, message = "hqk,hkd->hqd"}> : () -> ()
    %cst_36 = arith.constant dense<0.000000e+00> : vector<4x8x8xf32>
    %96 = tpu.matmul %95, %75, %cst_36 {dimension_numbers = #tpu.dot_dimension_numbers<[2], [1], [1], [2], [0, 0, 0, 1, 1, 2], [0], [0]>} : vector<4x8x8xf32>, vector<4x8x8xf32>, vector<4x8x8xf32> -> vector<4x8x8xf32>
    "tpu.trace_stop"() : () -> ()
    "tpu.trace_start"() <{level = 10 : i32, message = "hqd,hdn->hqn"}> : () -> ()
    %cst_37 = arith.constant dense<0.000000e+00> : vector<4x8x32xf32>
    %97 = tpu.matmul %96, %23, %cst_37 {dimension_numbers = #tpu.dot_dimension_numbers<[2], [1], [1], [2], [0, 0, 0, 1, 1, 2], [0], [0]>} : vector<4x8x8xf32>, vector<4x8x32xf32>, vector<4x8x32xf32> -> vector<4x8x32xf32>
    "tpu.trace_stop"() : () -> ()
    %cst_38 = arith.constant dense<0.000000e+00> : vector<8x32xf32>
    %98 = vector.multi_reduction <add>, %97, %cst_38 [0] : vector<4x8x32xf32> to vector<8x32xf32>
    %99 = arith.addf %1, %98 : vector<8x32xf32>
    %100 = vector.broadcast %9 : vector<1x32xf32> to vector<8x32xf32>
    %101 = arith.addf %99, %100 : vector<8x32xf32>
    %cst_39 = arith.constant dense<0.000000e+00> : vector<8xf32>
    %102 = vector.multi_reduction <add>, %101, %cst_39 [1] : vector<8x32xf32> to vector<8xf32>
    %103 = vector.shape_cast %102 : vector<8xf32> to vector<8x1xf32>
    %cst_40 = arith.constant 3.200000e+01 : f32
    %104 = vector.broadcast %cst_40 : f32 to vector<8x1xf32>
    %105 = arith.divf %103, %104 : vector<8x1xf32>
    %106 = vector.broadcast %105 : vector<8x1xf32> to vector<8x32xf32>
    %107 = arith.subf %101, %106 : vector<8x32xf32>
    %108 = arith.mulf %107, %107 : vector<8x32xf32>
    %cst_41 = arith.constant dense<0.000000e+00> : vector<8xf32>
    %109 = vector.multi_reduction <add>, %108, %cst_41 [1] : vector<8x32xf32> to vector<8xf32>
    %110 = vector.shape_cast %109 : vector<8xf32> to vector<8x1xf32>
    %cst_42 = arith.constant 0.0322580636 : f32
    %111 = vector.broadcast %cst_42 : f32 to vector<8x1xf32>
    %112 = arith.mulf %110, %111 : vector<8x1xf32>
    %113 = vector.broadcast %105 : vector<8x1xf32> to vector<8x32xf32>
    %114 = arith.subf %101, %113 : vector<8x32xf32>
    %115 = vector.broadcast %13 : vector<1x32xf32> to vector<8x32xf32>
    %116 = arith.mulf %115, %114 : vector<8x32xf32>
    %117 = math.sqrt %112 : vector<8x1xf32>
    %cst_43 = arith.constant 9.99999997E-7 : f32
    %118 = vector.broadcast %cst_43 : f32 to vector<8x1xf32>
    %119 = arith.addf %117, %118 : vector<8x1xf32>
    %120 = vector.broadcast %119 : vector<8x1xf32> to vector<8x32xf32>
    %121 = arith.divf %116, %120 : vector<8x32xf32>
    %122 = vector.broadcast %14 : vector<1x32xf32> to vector<8x32xf32>
    %123 = arith.addf %121, %122 : vector<8x32xf32>
    %cst_44 = arith.constant dense<0.000000e+00> : vector<8x64xf32>
    %124 = tpu.matmul %123, %6, %cst_44 {dimension_numbers = #tpu.dot_dimension_numbers<[1], [0], [0], [1], [0, 0, 1, 1], [], []>} : vector<8x32xf32>, vector<32x64xf32>, vector<8x64xf32> -> vector<8x64xf32>
    %125 = vector.broadcast %7 : vector<1x64xf32> to vector<8x64xf32>
    %126 = arith.addf %124, %125 : vector<8x64xf32>
    %cst_45 = arith.constant 0.000000e+00 : f32
    %127 = vector.broadcast %cst_45 : f32 to vector<8x64xf32>
    %128 = arith.maximumf %126, %127 : vector<8x64xf32>
    %cst_46 = arith.constant dense<0.000000e+00> : vector<8x32xf32>
    %129 = tpu.matmul %128, %8, %cst_46 {dimension_numbers = #tpu.dot_dimension_numbers<[1], [0], [0], [1], [0, 0, 1, 1], [], []>} : vector<8x64xf32>, vector<64x32xf32>, vector<8x32xf32> -> vector<8x32xf32>
    %130 = arith.addf %101, %129 : vector<8x32xf32>
    %131 = vector.broadcast %10 : vector<1x32xf32> to vector<8x32xf32>
    %132 = arith.addf %130, %131 : vector<8x32xf32>
    %c0_47 = arith.constant 0 : index
    %c0_48 = arith.constant 0 : index
    %c0_49 = arith.constant 0 : index
    %133 = vector.load %arg6[%c0_47, %c0_48, %c0_49] : memref<1x8x32xf32, #tpu.memory_space<vmem>>, vector<1x8x32xf32>
    %134 = vector.shape_cast %133 : vector<1x8x32xf32> to vector<8x32xf32>
    %135 = vector.shape_cast %132 : vector<8x32xf32> to vector<1x8x32xf32>
    tpu.vector_store %arg6[%c0_47, %c0_48, %c0_49], %135 {strides = array<i32>} : memref<1x8x32xf32, #tpu.memory_space<vmem>>, vector<1x8x32xf32>,
    return
  }
  func.func @transform_0(%arg0: i32) -> (i32, i32, i32) {
    %c0_i32 = arith.constant 0 : i32
    %c0_i32_0 = arith.constant 0 : i32
    %c0_i32_1 = arith.constant 0 : i32
    return %arg0, %c0_i32, %c0_i32_0 : i32, i32, i32
  }
  func.func @transform_1(%arg0: i32) -> (i32, i32, i32) {
    %c0_i32 = arith.constant 0 : i32
    %c0_i32_0 = arith.constant 0 : i32
    %c0_i32_1 = arith.constant 0 : i32
    return %arg0, %c0_i32, %c0_i32_0 : i32, i32, i32
  }
  func.func @transform_2(%arg0: i32) -> (i32, i32) {
    %c0_i32 = arith.constant 0 : i32
    %c0_i32_0 = arith.constant 0 : i32
    %c0_i32_1 = arith.constant 0 : i32
    return %c0_i32, %c0_i32_0 : i32, i32
  }
  func.func @transform_3(%arg0: i32) -> (i32, i32) {
    %c0_i32 = arith.constant 0 : i32
    %c0_i32_0 = arith.constant 0 : i32
    %c0_i32_1 = arith.constant 0 : i32
    return %c0_i32, %c0_i32_0 : i32, i32
  }
  func.func @transform_4(%arg0: i32) -> (i32, i32) {
    %c0_i32 = arith.constant 0 : i32
    %c0_i32_0 = arith.constant 0 : i32
    %c0_i32_1 = arith.constant 0 : i32
    return %c0_i32, %c0_i32_0 : i32, i32
  }
  func.func @transform_5(%arg0: i32) -> (i32, i32, i32) {
    %c0_i32 = arith.constant 0 : i32
    %c0_i32_0 = arith.constant 0 : i32
    %c0_i32_1 = arith.constant 0 : i32
    return %arg0, %c0_i32, %c0_i32_0 : i32, i32, i32
  }
}

</mosaic_0001>

<llo_original>
// kernel: tpu_custom_call.1
$region0: #{tpu_custom_call.1}
  #allocation0 [shape = 'u32[]', space=smem, size = 0x4, offset = 0x4, fixed_abs, tag = 'smem constant byte address 0x4 - core index']
  #allocation1 [shape = 'u32[144,128]{1,0:T(1,128)}', space=vmem, size = 0x12000, scoped, tag = 'internal scratch']
  %s0 = inlined_call_operand.vmem [shape: f32[2,8,32], index: 0, kind: input, shape index: {}]
  %s1 = inlined_call_operand.vmem [shape: f32[2,1,8], index: 1, kind: input, shape index: {}]
  %s2 = inlined_call_operand.vmem [shape: f32[33,96], index: 2, kind: input, shape index: {}]
  %s3 = inlined_call_operand.vmem [shape: f32[33,64], index: 3, kind: input, shape index: {}]
  %s4 = inlined_call_operand.vmem [shape: f32[144,32], index: 4, kind: input, shape index: {}]
  %s5 = inlined_call_operand.hbm [shape: f32[2,8,32], index: 5, kind: output, shape index: {}]
  %s6 = sld [smem:[#allocation0]]
  $region53: #{tpu_custom_call.1} parent=0
    _
  %s8 = ssub.s32 1, %s6
  %s9 = scalar_select 0, %s8, %s6
  $region1: #{tpu_custom_call.1} parent=0
    #allocation2 [shape = 'u8[8192]{0}', space=vmem, size = 0x2000, scoped, tag = 'output window, operand 0']
    #allocation3 [shape = 's32[2]{0}', space=sflag, size = 0x8, scoped, tag = 'scoped memory for tpu_custom_call.1']
    %10 = vsyncpa [#allocation3], 0
    %s11 = scalar_lea.sflag [#allocation3], 1
    %12 = vsyncpa %s11, 0
    loop: start=0, step=1, limit=4
    $region2: #{tpu_custom_call.1} parent=1 // loop_pre_header
      _
    $region3: #{tpu_custom_call.1} parent=1 // loop_header
      %s14 = sphi 0, %s18
      %p15 = scmp.ge.s32.totalorder %s14, 4
      %s24 = sphi 0, %s26
      %s27 = sphi 0, %s24
      %s28 = sphi 0, %s27
      %s44 = sphi 0, %s28
      %s50 = sphi 0, %s52
      %s53 = sphi 0, %s50
      %s54 = sphi 0, %s53
      %s70 = sphi 0, %s54
      %s74 = sphi 0, %s74
      %s76 = sphi 0, %s74
      %s77 = sphi 0, %s76
      %s91 = sphi 0, %s77
      %s95 = sphi 0, %s95
      %s97 = sphi 0, %s95
      %s98 = sphi 0, %s97
      %s112 = sphi 0, %s98
      %s116 = sphi 0, %s116
      %s118 = sphi 0, %s116
      %s119 = sphi 0, %s118
      %s133 = sphi 0, %s119
      %s139 = sphi 0, %s141
      %s142 = sphi 0, %s139
      %s143 = sphi 0, %s142
      %s159 = sphi 0, %s143
    $region4: #{tpu_custom_call.1} parent=1 // loop_header_branch
      %17 = sbr.rel (%p15) target = $region8
    $region5: #{tpu_custom_call.1} parent=1 // loop_body
      %s19 = ssub.s32 %s14, 1
      %s20 = ssub.s32 %s14, 2
      %s21 = sadd.s32 %s14, 1
      %s22 = ssub.s32 %s14, %s21
      %p23 = scmp.eq.s32.totalorder %s22, 0
      %s25 = sadd.s32 %s24, 1
      %s26 = scalar_select %p23, %s24, %s25
      %p29 = pneg %p23
      %p30 = scmp.eq.s32.totalorder %s14, 1
      %p31 = por %p29, %p30
      %p32 = scmp.ne.s32.totalorder %s24, %s27
      %p33 = scmp.eq.s32.totalorder %s14, 0
      %p34 = por %p32, %p33
      %p35 = scmp.ne.s32.totalorder %s24, %s27
      %p36 = scmp.eq.s32.totalorder %s19, 1
      %p37 = por %p35, %p36
      %p38 = scmp.ne.s32.totalorder %s27, %s28
      %p39 = scmp.eq.s32.totalorder %s19, 0
      %p40 = por %p38, %p39
      %p41 = scmp.ne.s32.totalorder %s27, %s28
      %p42 = scmp.eq.s32.totalorder %s20, 1
      %p43 = por %p41, %p42
      %p45 = scmp.ne.s32.totalorder %s28, %s44
      %p46 = scmp.eq.s32.totalorder %s20, 0
      %p47 = por %p45, %p46
      %s48 = ssub.s32 %s14, %s21
      %p49 = scmp.eq.s32.totalorder %s48, 0
      %s51 = sadd.s32 %s50, 1
      %s52 = scalar_select %p49, %s50, %s51
      %p55 = pneg %p49
      %p56 = scmp.eq.s32.totalorder %s14, 1
      %p57 = por %p55, %p56
      %p58 = scmp.ne.s32.totalorder %s50, %s53
      %p59 = scmp.eq.s32.totalorder %s14, 0
      %p60 = por %p58, %p59
      %p61 = scmp.ne.s32.totalorder %s50, %s53
      %p62 = scmp.eq.s32.totalorder %s19, 1
      %p63 = por %p61, %p62
      %p64 = scmp.ne.s32.totalorder %s53, %s54
      %p65 = scmp.eq.s32.totalorder %s19, 0
      %p66 = por %p64, %p65
      %p67 = scmp.ne.s32.totalorder %s53, %s54
      %p68 = scmp.eq.s32.totalorder %s20, 1
      %p69 = por %p67, %p68
      %p71 = scmp.ne.s32.totalorder %s54, %s70
      %p72 = scmp.eq.s32.totalorder %s20, 0
      %p73 = por %p71, %p72
      %s75 = sadd.s32 %s74, 1
      %p78 = scmp.eq.s32.totalorder %s14, 1
      %p79 = scmp.ne.s32.totalorder %s74, %s76
      %p80 = scmp.eq.s32.totalorder %s14, 0
      %p81 = por %p79, %p80
      %p82 = scmp.ne.s32.totalorder %s74, %s76
      %p83 = scmp.eq.s32.totalorder %s19, 1
      %p84 = por %p82, %p83
      %p85 = scmp.ne.s32.totalorder %s76, %s77
      %p86 = scmp.eq.s32.totalorder %s19, 0
      %p87 = por %p85, %p86
      %p88 = scmp.ne.s32.totalorder %s76, %s77
      %p89 = scmp.eq.s32.totalorder %s20, 1
      %p90 = por %p88, %p89
      %p92 = scmp.ne.s32.totalorder %s77, %s91
      %p93 = scmp.eq.s32.totalorder %s20, 0
      %p94 = por %p92, %p93
      %s96 = sadd.s32 %s95, 1
      %p99 = scmp.eq.s32.totalorder %s14, 1
      %p100 = scmp.ne.s32.totalorder %s95, %s97
      %p101 = scmp.eq.s32.totalorder %s14, 0
      %p102 = por %p100, %p101
      %p103 = scmp.ne.s32.totalorder %s95, %s97
      %p104 = scmp.eq.s32.totalorder %s19, 1
      %p105 = por %p103, %p104
      %p106 = scmp.ne.s32.totalorder %s97, %s98
      %p107 = scmp.eq.s32.totalorder %s19, 0
      %p108 = por %p106, %p107
      %p109 = scmp.ne.s32.totalorder %s97, %s98
      %p110 = scmp.eq.s32.totalorder %s20, 1
      %p111 = por %p109, %p110
      %p113 = scmp.ne.s32.totalorder %s98, %s112
      %p114 = scmp.eq.s32.totalorder %s20, 0
      %p115 = por %p113, %p114
      %s117 = sadd.s32 %s116, 1
      %p120 = scmp.eq.s32.totalorder %s14, 1
      %p121 = scmp.ne.s32.totalorder %s116, %s118
      %p122 = scmp.eq.s32.totalorder %s14, 0
      %p123 = por %p121, %p122
      %p124 = scmp.ne.s32.totalorder %s116, %s118
      %p125 = scmp.eq.s32.totalorder %s19, 1
      %p126 = por %p124, %p125
      %p127 = scmp.ne.s32.totalorder %s118, %s119
      %p128 = scmp.eq.s32.totalorder %s19, 0
      %p129 = por %p127, %p128
      %p130 = scmp.ne.s32.totalorder %s118, %s119
      %p131 = scmp.eq.s32.totalorder %s20, 1
      %p132 = por %p130, %p131
      %p134 = scmp.ne.s32.totalorder %s119, %s133
      %p135 = scmp.eq.s32.totalorder %s20, 0
      %p136 = por %p134, %p135
      %s137 = ssub.s32 %s14, %s21
      %p138 = scmp.eq.s32.totalorder %s137, 0
      %s140 = sadd.s32 %s139, 1
      %s141 = scalar_select %p138, %s139, %s140
      %p144 = pneg %p138
      %p145 = scmp.eq.s32.totalorder %s14, 1
      %p146 = por %p144, %p145
      %p147 = scmp.ne.s32.totalorder %s139, %s142
      %p148 = scmp.eq.s32.totalorder %s14, 0
      %p149 = por %p147, %p148
      %p150 = scmp.ne.s32.totalorder %s139, %s142
      %p151 = scmp.eq.s32.totalorder %s19, 1
      %p152 = por %p150, %p151
      %p153 = scmp.ne.s32.totalorder %s142, %s143
      %p154 = scmp.eq.s32.totalorder %s19, 0
      %p155 = por %p153, %p154
      %p156 = scmp.ne.s32.totalorder %s142, %s143
      %p157 = scmp.eq.s32.totalorder %s20, 1
      %p158 = por %p156, %p157
      %p160 = scmp.ne.s32.totalorder %s143, %s159
      %p161 = scmp.eq.s32.totalorder %s20, 0
      %p162 = por %p160, %p161
      %p163 = scmp.le.s32.totalorder 1, %s14
      %p164 = scmp.lt.s32.totalorder %s14, 3
      %p165 = pnand %p163, %p164
      %p166 = pneg %p165
      // Predicated region
      $region9: #{tpu_custom_call.1} parent=5 // pred_check
        _
      $region10: #{tpu_custom_call.1} parent=5 // pred_check_branch
        %168 = sbr.rel (%p165) target = $region12
      $region11: #{tpu_custom_call.1} parent=5 // pred_region
        %s169 = ssub.s32 %s14, 1
        // Predicated region
        $region13: #{tpu_custom_call.1} parent=11 // pred_check
          %p170 = pneg %p87
        $region14: #{tpu_custom_call.1} parent=11 // pred_check_branch
          %172 = sbr.rel (%p170) target = $region16
        $region15: #{tpu_custom_call.1} parent=11 // pred_region
          _
        $region16: #{tpu_custom_call.1} parent=11 // pred_fallthru
          _
        // Predicated region
        $region17: #{tpu_custom_call.1} parent=11 // pred_check
          %p173 = pneg %p108
        $region18: #{tpu_custom_call.1} parent=11 // pred_check_branch
          %175 = sbr.rel (%p173) target = $region20
        $region19: #{tpu_custom_call.1} parent=11 // pred_region
          _
        $region20: #{tpu_custom_call.1} parent=11 // pred_fallthru
          _
        // Predicated region
        $region21: #{tpu_custom_call.1} parent=11 // pred_check
          %p176 = pneg %p129
        $region22: #{tpu_custom_call.1} parent=11 // pred_check_branch
          %178 = sbr.rel (%p176) target = $region24
        $region23: #{tpu_custom_call.1} parent=11 // pred_region
          _
        $region24: #{tpu_custom_call.1} parent=11 // pred_fallthru
          _
      $region12: #{tpu_custom_call.1} parent=5 // pred_fallthru
        _
      %p179 = scmp.lt.s32.totalorder %s14, 2
      // Predicated region
      $region25: #{tpu_custom_call.1} parent=5 // pred_check
        %p180 = pneg %p179
      $region26: #{tpu_custom_call.1} parent=5 // pred_check_branch
        %182 = sbr.rel (%p180) target = $region28
      $region27: #{tpu_custom_call.1} parent=5 // pred_region
        // Predicated region
        $region29: #{tpu_custom_call.1} parent=27 // pred_check
          %p183 = pneg %p34
        $region30: #{tpu_custom_call.1} parent=27 // pred_check_branch
          %185 = sbr.rel (%p183) target = $region32
        $region31: #{tpu_custom_call.1} parent=27 // pred_region
          %p186 = scmp.lt.s32.totalorder %s14, 1
          %s187 = scalar_select %p186, %s14, 1
          %s188 = smul.addr %s187, 8
          %s189 = scalar_lea.vmem %s0, %s188
        $region32: #{tpu_custom_call.1} parent=27 // pred_fallthru
          _
        // Predicated region
        $region33: #{tpu_custom_call.1} parent=27 // pred_check
          %p190 = pneg %p60
        $region34: #{tpu_custom_call.1} parent=27 // pred_check_branch
          %192 = sbr.rel (%p190) target = $region36
        $region35: #{tpu_custom_call.1} parent=27 // pred_region
          %p193 = scmp.lt.s32.totalorder %s14, 1
          %s194 = scalar_select %p193, %s14, 1
          %s195 = scalar_lea.vmem %s1, %s194
        $region36: #{tpu_custom_call.1} parent=27 // pred_fallthru
          _
      $region28: #{tpu_custom_call.1} parent=5 // pred_fallthru
        _
      %p196 = scmp.le.s32.totalorder 1, %s14
      %p197 = scmp.lt.s32.totalorder %s14, 3
      %p198 = pnand %p196, %p197
      %p199 = pneg %p198
      // Predicated region
      $region37: #{tpu_custom_call.1} parent=5 // pred_check
        _
      $region38: #{tpu_custom_call.1} parent=5 // pred_check_branch
        %201 = sbr.rel (%p198) target = $region40
      $region39: #{tpu_custom_call.1} parent=5 // pred_region
        %s202 = ssub.s32 %s14, 1
        %p203 = scmp.lt.s32.totalorder %s19, 1
        %s204 = scalar_select %p203, %s19, 1
        %s205 = smul.addr %s204, 8
        %s206 = scalar_lea.vmem %s0, %s205
        %p207 = pneg %p40
        %p208 = pneg %p37
        %p209 = scmp.lt.s32.totalorder %s19, 1
        %s210 = scalar_select %p209, %s19, 1
        %s211 = scalar_lea.vmem %s1, %s210
        %p212 = pneg %p66
        %p213 = pneg %p63
        %p214 = pneg %p87
        %p215 = pneg %p84
        %p216 = pneg %p108
        %p217 = pneg %p105
        %p218 = pneg %p129
        %p219 = pneg %p126
        %p220 = pneg %p155
        %p221 = pneg %p152
        %s222 = sand.u32 %s142, 1
        %s223 = scalar_lea.sflag [#allocation3], %s222
        %s224 = sand.u32 %s142, 1
        %s225 = smul.addr %s224, 8
        %s226 = scalar_lea.vmem [#allocation2], %s225
        %p227 = scmp.lt.s32.totalorder %s19, 1
        %s228 = scalar_select %p227, %s19, 1
        %s229 = smul.addr %s228, 8
        %s230 = scalar_lea.vmem %s0, %s229
        %p231 = scmp.lt.s32.totalorder %s19, 1
        %s232 = scalar_select %p231, %s19, 1
        %s233 = scalar_lea.vmem %s1, %s232
        %v234 = vld [vmem:[%s230] sm:$0xff]
        %v235 = vld [vmem:[%s233] sm:$0x1]
        %v236 = vld [vmem:[%s2] sm:$0xff]
        %v237 = vld [vmem:[%s2 + $0x8] sm:$0xff]
        %v238 = vld [vmem:[%s2 + $0x10] sm:$0xff]
        %v239 = vld [vmem:[%s2 + $0x18] sm:$0xff]
        %v240 = vld [vmem:[%s2 + $0x20] sm:$0x1]
        %v241 = vld [vmem:[%s3] sm:$0xff]
        %v242 = vld [vmem:[%s3 + $0x8] sm:$0xff]
        %v243 = vld [vmem:[%s3 + $0x10] sm:$0xff]
        %v244 = vld [vmem:[%s3 + $0x18] sm:$0xff]
        %v245 = vld [vmem:[%s3 + $0x20] sm:$0x1]
        %v246 = vld [vmem:[%s4 + $0x20] sm:$0xff]
        %v247 = vld [vmem:[%s4 + $0x28] sm:$0xff]
        %v248 = vld [vmem:[%s4 + $0x30] sm:$0xff]
        %v249 = vld [vmem:[%s4 + $0x38] sm:$0xff]
        %v250 = vld [vmem:[%s4 + $0x40] sm:$0xff]
        %v251 = vld [vmem:[%s4 + $0x48] sm:$0xff]
        %v252 = vld [vmem:[%s4 + $0x50] sm:$0xff]
        %v253 = vld [vmem:[%s4 + $0x58] sm:$0xff]
        %v254 = vld [vmem:[%s4 + $0x60] sm:$0x1]
        %v255 = vld [vmem:[%s4 + $0x68] sm:$0x1]
        %v256 = vld [vmem:[%s4 + $0x70] sm:$0x1]
        %v257 = vld [vmem:[%s4 + $0x78] sm:$0x1]
        %v258 = vld [vmem:[%s4 + $0x80] sm:$0x1]
        %v259 = vld [vmem:[%s4 + $0x88] sm:$0x1]
        %v260 = vld [vmem:[%s4] sm:$0xff]
        %v261 = vld [vmem:[%s4 + $0x8] sm:$0xff]
        %v262 = vld [vmem:[%s4 + $0x10] sm:$0xff]
        %v263 = vld [vmem:[%s4 + $0x18] sm:$0xff]
        %vm264 = vcmask 261120
        %v265 = vsel %vm264, %v234, 0.0
        %266 = vadd.xlane.f32.xlu0 %v265
        %v267 = vpop.xlane.xlu0 %266
        %v268 = vrcp.pop 32.0
        %v269 = vmul.f32 %v267, %v268
        %v270 = vsub.f32 %v234, %v269
        %v271 = vmul.f32 %v270, %v270
        %v272 = vsel %vm264, %v271, 0.0
        %273 = vadd.xlane.f32.xlu0 %v272
        %v274 = vpop.xlane.xlu0 %273
        %v275 = vmul.f32 %v274, 0.032258064
        %v276 = vlaneseq
        %v277 = vshrl.u32 %v276, 7
        %v278 = vsub.s32 0, %v277
        %v279 = vrot.slane %v256, %v278
        %v280 = vmul.f32 %v279, %v270
        %v281 = vrsqrt.pop %v275
        %v282 = vmul.f32 %v275, %v281
        %vm283 = vcmp.eq.f32.partialorder %v275, inf
        %v284 = vsel %vm283, %v275, %v282
        %vm285 = vcmp.eq.f32.partialorder %v275, 0.0
        %v286 = vand.u32 %v275, 2147483648
        %v287 = vsel %vm285, %v286, %v284
        %v288 = vadd.f32 %v287, 1e-06
        %v289 = vrcp.pop %v288
        %v290 = vmul.f32 %v280, %v289
        %v291 = vlaneseq
        %v292 = vshrl.u32 %v291, 7
        %v293 = vsub.s32 0, %v292
        %v294 = vrot.slane %v257, %v293
        %v295 = vadd.f32 %v290, %v294
        %v296 = vlaneseq
        %v297 = vshrl.u32 %v296, 7
        %v298 = vsub.s32 0, %v297
        %v299 = vrot.slane %v240, %v298
        %v301 = vsel %vm264, %v295, 0
        %303 = vmatprep.subr.mxu0 0.0
        %304 = vmatpush1.msra.mxu0 0.0
        %305 = vmatprep.subr.mxu0 0.0
        %306 = vmatpush1.msra.mxu0 0.0
        %307 = vmatprep.subr.mxu0 0.0
        %308 = vmatpush1.msra.mxu0 0.0
        %309 = vmatprep.subr.mxu0 0.0
        %310 = vmatpush1.msra.mxu0 0.0
        %311 = vmatprep.subr.mxu0 0.0
        %312 = vmatpush1.msra.mxu0 0.0
        %313 = vmatprep.subr.mxu0 0.0
        %314 = vmatpush1.msra.mxu0 0.0
        %315 = vmatprep.subr.mxu0 0.0
        %316 = vmatpush1.msra.mxu0 0.0
        %317 = vmatprep.subr.mxu0 0.0
        %318 = vmatpush1.msra.mxu0 0.0
        %319 = vmatprep.subr.mxu0 0.0
        %320 = vmatpush1.msra.mxu0 0.0
        %321 = vmatprep.subr.mxu0 0.0
        %322 = vmatpush1.msra.mxu0 0.0
        %323 = vmatprep.subr.mxu0 0.0
        %324 = vmatpush1.msra.mxu0 0.0
        %325 = vmatprep.subr.mxu0 0.0
        %326 = vmatpush1.msra.mxu0 0.0
        %327 = vmatprep.subr.mxu0 0.0
        %328 = vmatpush1.msra.mxu0 %v239
        %329 = vmatprep.subr.mxu0 0.0
        %330 = vmatpush1.msra.mxu0 %v238
        %331 = vmatprep.subr.mxu0 0.0
        %332 = vmatpush1.msra.mxu0 %v237
        %333 = vmatprep.subr.mxu0 0.0
        %334 = vmatpush1.msra.mxu0 %v236
        %335 = vmatprep.subr.mxu0 0.0
        %336 = vmatpush2.msra.mxu0 0.0
        %337 = vmatprep.subr.mxu0 0.0
        %338 = vmatpush2.msra.mxu0 0.0
        %339 = vmatprep.subr.mxu0 0.0
        %340 = vmatpush2.msra.mxu0 0.0
        %341 = vmatprep.subr.mxu0 0.0
        %342 = vmatpush2.msra.mxu0 0.0
        %343 = vmatprep.subr.mxu0 0.0
        %344 = vmatpush2.msra.mxu0 0.0
        %345 = vmatprep.subr.mxu0 0.0
        %346 = vmatpush2.msra.mxu0 0.0
        %347 = vmatprep.subr.mxu0 0.0
        %348 = vmatpush2.msra.mxu0 0.0
        %349 = vmatprep.subr.mxu0 0.0
        %350 = vmatpush2.msra.mxu0 0.0
        %351 = vmatprep.subr.mxu0 0.0
        %352 = vmatpush2.msra.mxu0 0.0
        %353 = vmatprep.subr.mxu0 0.0
        %354 = vmatpush2.msra.mxu0 0.0
        %355 = vmatprep.subr.mxu0 0.0
        %356 = vmatpush2.msra.mxu0 0.0
        %357 = vmatprep.subr.mxu0 0.0
        %358 = vmatpush2.msra.mxu0 0.0
        %359 = vmatprep.subr.mxu0 0.0
        %360 = vmatpush2.msra.mxu0 0.0
        %361 = vmatprep.subr.mxu0 0.0
        %362 = vmatpush2.msra.mxu0 0.0
        %363 = vmatprep.subr.mxu0 0.0
        %364 = vmatpush2.msra.mxu0 0.0
        %365 = vmatprep.subr.mxu0 0.0
        %366 = vmatpush2.msra.mxu0 0.0
        %367 = vmatprep.mubr.f32.mxu0 0.0
        %368 = vmatmul.mubr.f32.gmra.mxu0 %v301
        %v369 = vpop.f32.mrf.mxu0
        %v370 = vadd.f32 %v299, %v369
        %v371 = vpop.f32.mrf.mxu0
        %372 = vdwg.mxu0
        %374 = vrot.lane.b32.xlu0 %v370, 120
        %v375 = vpop.permute.xlu0 %374
        %376 = vrot.lane.b32.xlu0 %v370, 112
        %v377 = vpop.permute.xlu0 %376
        %378 = vrot.lane.b32.xlu0 %v370, 104
        %v379 = vpop.permute.xlu0 %378
        %380 = vrot.lane.b32.xlu0 %v370, 96
        %v381 = vpop.permute.xlu0 %380
        %vm382 = vcmask 64512
        %v383 = vsel %vm382, %v370, 0
        %v385 = vsel %vm382, %v381, 0
        %387 = vmatprep.subr.mxu0 0.0
        %388 = vmatpush1.xpose.msra.mxu0 0.0
        %389 = vmatprep.subr.mxu0 0.0
        %390 = vmatpush1.xpose.msra.mxu0 0.0
        %391 = vmatprep.subr.mxu0 0.0
        %392 = vmatpush1.xpose.msra.mxu0 0.0
        %393 = vmatprep.subr.mxu0 0.0
        %394 = vmatpush1.xpose.msra.mxu0 0.0
        %395 = vmatprep.subr.mxu0 0.0
        %396 = vmatpush1.xpose.msra.mxu0 0.0
        %397 = vmatprep.subr.mxu0 0.0
        %398 = vmatpush1.xpose.msra.mxu0 0.0
        %399 = vmatprep.subr.mxu0 0.0
        %400 = vmatpush1.xpose.msra.mxu0 0.0
        %401 = vmatprep.subr.mxu0 0.0
        %402 = vmatpush1.xpose.msra.mxu0 0.0
        %403 = vmatprep.subr.mxu0 0.0
        %404 = vmatpush1.xpose.msra.mxu0 0.0
        %405 = vmatprep.subr.mxu0 0.0
        %406 = vmatpush1.xpose.msra.mxu0 0.0
        %407 = vmatprep.subr.mxu0 0.0
        %408 = vmatpush1.xpose.msra.mxu0 0.0
        %409 = vmatprep.subr.mxu0 0.0
        %410 = vmatpush1.xpose.msra.mxu0 0.0
        %411 = vmatprep.subr.mxu0 0.0
        %412 = vmatpush1.xpose.msra.mxu0 0.0
        %413 = vmatprep.subr.mxu0 0.0
        %414 = vmatpush1.xpose.msra.mxu0 0.0
        %415 = vmatprep.subr.mxu0 0.0
        %416 = vmatpush1.xpose.msra.mxu0 0.0
        %417 = vmatprep.subr.mxu0 0.0
        %418 = vmatpush1.xpose.msra.mxu0 %v385
        %419 = vmatprep.subr.mxu0 0.0
        %420 = vmatpush2.xpose.msra.mxu0 0.0
        %421 = vmatprep.subr.mxu0 0.0
        %422 = vmatpush2.xpose.msra.mxu0 0.0
        %423 = vmatprep.subr.mxu0 0.0
        %424 = vmatpush2.xpose.msra.mxu0 0.0
        %425 = vmatprep.subr.mxu0 0.0
        %426 = vmatpush2.xpose.msra.mxu0 0.0
        %427 = vmatprep.subr.mxu0 0.0
        %428 = vmatpush2.xpose.msra.mxu0 0.0
        %429 = vmatprep.subr.mxu0 0.0
        %430 = vmatpush2.xpose.msra.mxu0 0.0
        %431 = vmatprep.subr.mxu0 0.0
        %432 = vmatpush2.xpose.msra.mxu0 0.0
        %433 = vmatprep.subr.mxu0 0.0
        %434 = vmatpush2.xpose.msra.mxu0 0.0
        %435 = vmatprep.subr.mxu0 0.0
        %436 = vmatpush2.xpose.msra.mxu0 0.0
        %437 = vmatprep.subr.mxu0 0.0
        %438 = vmatpush2.xpose.msra.mxu0 0.0
        %439 = vmatprep.subr.mxu0 0.0
        %440 = vmatpush2.xpose.msra.mxu0 0.0
        %441 = vmatprep.subr.mxu0 0.0
        %442 = vmatpush2.xpose.msra.mxu0 0.0
        %443 = vmatprep.subr.mxu0 0.0
        %444 = vmatpush2.xpose.msra.mxu0 0.0
        %445 = vmatprep.subr.mxu0 0.0
        %446 = vmatpush2.xpose.msra.mxu0 0.0
        %447 = vmatprep.subr.mxu0 0.0
        %448 = vmatpush2.xpose.msra.mxu0 0.0
        %449 = vmatprep.subr.mxu0 0.0
        %450 = vmatpush2.xpose.msra.mxu0 0.0
        %451 = vmatprep.mubr.f32.mxu0 0.0
        %452 = vmatmul.mubr.f32.gmra.mxu0 %v383
        %v453 = vpop.f32.mrf.mxu0
        %v454 = vadd.f32 0.0, %v453
        %v455 = vpop.f32.mrf.mxu0
        %456 = vdwg.mxu0
        %457 = vrot.lane.b32.xlu0 %v375, 96
        %v458 = vpop.permute.xlu0 %457
        %v459 = vsel %vm382, %v375, 0
        %v461 = vsel %vm382, %v458, 0
        %463 = vmatprep.subr.mxu0 0.0
        %464 = vmatpush1.xpose.msra.mxu0 0.0
        %465 = vmatprep.subr.mxu0 0.0
        %466 = vmatpush1.xpose.msra.mxu0 0.0
        %467 = vmatprep.subr.mxu0 0.0
        %468 = vmatpush1.xpose.msra.mxu0 0.0
        %469 = vmatprep.subr.mxu0 0.0
        %470 = vmatpush1.xpose.msra.mxu0 0.0
        %471 = vmatprep.subr.mxu0 0.0
        %472 = vmatpush1.xpose.msra.mxu0 0.0
        %473 = vmatprep.subr.mxu0 0.0
        %474 = vmatpush1.xpose.msra.mxu0 0.0
        %475 = vmatprep.subr.mxu0 0.0
        %476 = vmatpush1.xpose.msra.mxu0 0.0
        %477 = vmatprep.subr.mxu0 0.0
        %478 = vmatpush1.xpose.msra.mxu0 0.0
        %479 = vmatprep.subr.mxu0 0.0
        %480 = vmatpush1.xpose.msra.mxu0 0.0
        %481 = vmatprep.subr.mxu0 0.0
        %482 = vmatpush1.xpose.msra.mxu0 0.0
        %483 = vmatprep.subr.mxu0 0.0
        %484 = vmatpush1.xpose.msra.mxu0 0.0
        %485 = vmatprep.subr.mxu0 0.0
        %486 = vmatpush1.xpose.msra.mxu0 0.0
        %487 = vmatprep.subr.mxu0 0.0
        %488 = vmatpush1.xpose.msra.mxu0 0.0
        %489 = vmatprep.subr.mxu0 0.0
        %490 = vmatpush1.xpose.msra.mxu0 0.0
        %491 = vmatprep.subr.mxu0 0.0
        %492 = vmatpush1.xpose.msra.mxu0 0.0
        %493 = vmatprep.subr.mxu0 0.0
        %494 = vmatpush1.xpose.msra.mxu0 %v461
        %495 = vmatprep.subr.mxu0 0.0
        %496 = vmatpush2.xpose.msra.mxu0 0.0
        %497 = vmatprep.subr.mxu0 0.0
        %498 = vmatpush2.xpose.msra.mxu0 0.0
        %499 = vmatprep.subr.mxu0 0.0
        %500 = vmatpush2.xpose.msra.mxu0 0.0
        %501 = vmatprep.subr.mxu0 0.0
        %502 = vmatpush2.xpose.msra.mxu0 0.0
        %503 = vmatprep.subr.mxu0 0.0
        %504 = vmatpush2.xpose.msra.mxu0 0.0
        %505 = vmatprep.subr.mxu0 0.0
        %506 = vmatpush2.xpose.msra.mxu0 0.0
        %507 = vmatprep.subr.mxu0 0.0
        %508 = vmatpush2.xpose.msra.mxu0 0.0
        %509 = vmatprep.subr.mxu0 0.0
        %510 = vmatpush2.xpose.msra.mxu0 0.0
        %511 = vmatprep.subr.mxu0 0.0
        %512 = vmatpush2.xpose.msra.mxu0 0.0
        %513 = vmatprep.subr.mxu0 0.0
        %514 = vmatpush2.xpose.msra.mxu0 0.0
        %515 = vmatprep.subr.mxu0 0.0
        %516 = vmatpush2.xpose.msra.mxu0 0.0
        %517 = vmatprep.subr.mxu0 0.0
        %518 = vmatpush2.xpose.msra.mxu0 0.0
        %519 = vmatprep.subr.mxu0 0.0
        %520 = vmatpush2.xpose.msra.mxu0 0.0
        %521 = vmatprep.subr.mxu0 0.0
        %522 = vmatpush2.xpose.msra.mxu0 0.0
        %523 = vmatprep.subr.mxu0 0.0
        %524 = vmatpush2.xpose.msra.mxu0 0.0
        %525 = vmatprep.subr.mxu0 0.0
        %526 = vmatpush2.xpose.msra.mxu0 0.0
        %527 = vmatprep.mubr.f32.mxu0 0.0
        %528 = vmatmul.mubr.f32.gmra.mxu0 %v459
        %v529 = vpop.f32.mrf.mxu0
        %v530 = vadd.f32 0.0, %v529
        %v531 = vpop.f32.mrf.mxu0
        %532 = vdwg.mxu0
        %533 = vrot.lane.b32.xlu0 %v377, 96
        %v534 = vpop.permute.xlu0 %533
        %v535 = vsel %vm382, %v377, 0
        %v537 = vsel %vm382, %v534, 0
        %539 = vmatprep.subr.mxu0 0.0
        %540 = vmatpush1.xpose.msra.mxu0 0.0
        %541 = vmatprep.subr.mxu0 0.0
        %542 = vmatpush1.xpose.msra.mxu0 0.0
        %543 = vmatprep.subr.mxu0 0.0
        %544 = vmatpush1.xpose.msra.mxu0 0.0
        %545 = vmatprep.subr.mxu0 0.0
        %546 = vmatpush1.xpose.msra.mxu0 0.0
        %547 = vmatprep.subr.mxu0 0.0
        %548 = vmatpush1.xpose.msra.mxu0 0.0
        %549 = vmatprep.subr.mxu0 0.0
        %550 = vmatpush1.xpose.msra.mxu0 0.0
        %551 = vmatprep.subr.mxu0 0.0
        %552 = vmatpush1.xpose.msra.mxu0 0.0
        %553 = vmatprep.subr.mxu0 0.0
        %554 = vmatpush1.xpose.msra.mxu0 0.0
        %555 = vmatprep.subr.mxu0 0.0
        %556 = vmatpush1.xpose.msra.mxu0 0.0
        %557 = vmatprep.subr.mxu0 0.0
        %558 = vmatpush1.xpose.msra.mxu0 0.0
        %559 = vmatprep.subr.mxu0 0.0
        %560 = vmatpush1.xpose.msra.mxu0 0.0
        %561 = vmatprep.subr.mxu0 0.0
        %562 = vmatpush1.xpose.msra.mxu0 0.0
        %563 = vmatprep.subr.mxu0 0.0
        %564 = vmatpush1.xpose.msra.mxu0 0.0
        %565 = vmatprep.subr.mxu0 0.0
        %566 = vmatpush1.xpose.msra.mxu0 0.0
        %567 = vmatprep.subr.mxu0 0.0
        %568 = vmatpush1.xpose.msra.mxu0 0.0
        %569 = vmatprep.subr.mxu0 0.0
        %570 = vmatpush1.xpose.msra.mxu0 %v537
        %571 = vmatprep.subr.mxu0 0.0
        %572 = vmatpush2.xpose.msra.mxu0 0.0
        %573 = vmatprep.subr.mxu0 0.0
        %574 = vmatpush2.xpose.msra.mxu0 0.0
        %575 = vmatprep.subr.mxu0 0.0
        %576 = vmatpush2.xpose.msra.mxu0 0.0
        %577 = vmatprep.subr.mxu0 0.0
        %578 = vmatpush2.xpose.msra.mxu0 0.0
        %579 = vmatprep.subr.mxu0 0.0
        %580 = vmatpush2.xpose.msra.mxu0 0.0
        %581 = vmatprep.subr.mxu0 0.0
        %582 = vmatpush2.xpose.msra.mxu0 0.0
        %583 = vmatprep.subr.mxu0 0.0
        %584 = vmatpush2.xpose.msra.mxu0 0.0
        %585 = vmatprep.subr.mxu0 0.0
        %586 = vmatpush2.xpose.msra.mxu0 0.0
        %587 = vmatprep.subr.mxu0 0.0
        %588 = vmatpush2.xpose.msra.mxu0 0.0
        %589 = vmatprep.subr.mxu0 0.0
        %590 = vmatpush2.xpose.msra.mxu0 0.0
        %591 = vmatprep.subr.mxu0 0.0
        %592 = vmatpush2.xpose.msra.mxu0 0.0
        %593 = vmatprep.subr.mxu0 0.0
        %594 = vmatpush2.xpose.msra.mxu0 0.0
        %595 = vmatprep.subr.mxu0 0.0
        %596 = vmatpush2.xpose.msra.mxu0 0.0
        %597 = vmatprep.subr.mxu0 0.0
        %598 = vmatpush2.xpose.msra.mxu0 0.0
        %599 = vmatprep.subr.mxu0 0.0
        %600 = vmatpush2.xpose.msra.mxu0 0.0
        %601 = vmatprep.subr.mxu0 0.0
        %602 = vmatpush2.xpose.msra.mxu0 0.0
        %603 = vmatprep.mubr.f32.mxu0 0.0
        %604 = vmatmul.mubr.f32.gmra.mxu0 %v535
        %v605 = vpop.f32.mrf.mxu0
        %v606 = vadd.f32 0.0, %v605
        %v607 = vpop.f32.mrf.mxu0
        %608 = vdwg.mxu0
        %609 = vrot.lane.b32.xlu0 %v379, 96
        %v610 = vpop.permute.xlu0 %609
        %v611 = vsel %vm382, %v379, 0
        %v613 = vsel %vm382, %v610, 0
        %615 = vmatprep.subr.mxu0 0.0
        %616 = vmatpush1.xpose.msra.mxu0 0.0
        %617 = vmatprep.subr.mxu0 0.0
        %618 = vmatpush1.xpose.msra.mxu0 0.0
        %619 = vmatprep.subr.mxu0 0.0
        %620 = vmatpush1.xpose.msra.mxu0 0.0
        %621 = vmatprep.subr.mxu0 0.0
        %622 = vmatpush1.xpose.msra.mxu0 0.0
        %623 = vmatprep.subr.mxu0 0.0
        %624 = vmatpush1.xpose.msra.mxu0 0.0
        %625 = vmatprep.subr.mxu0 0.0
        %626 = vmatpush1.xpose.msra.mxu0 0.0
        %627 = vmatprep.subr.mxu0 0.0
        %628 = vmatpush1.xpose.msra.mxu0 0.0
        %629 = vmatprep.subr.mxu0 0.0
        %630 = vmatpush1.xpose.msra.mxu0 0.0
        %631 = vmatprep.subr.mxu0 0.0
        %632 = vmatpush1.xpose.msra.mxu0 0.0
        %633 = vmatprep.subr.mxu0 0.0
        %634 = vmatpush1.xpose.msra.mxu0 0.0
        %635 = vmatprep.subr.mxu0 0.0
        %636 = vmatpush1.xpose.msra.mxu0 0.0
        %637 = vmatprep.subr.mxu0 0.0
        %638 = vmatpush1.xpose.msra.mxu0 0.0
        %639 = vmatprep.subr.mxu0 0.0
        %640 = vmatpush1.xpose.msra.mxu0 0.0
        %641 = vmatprep.subr.mxu0 0.0
        %642 = vmatpush1.xpose.msra.mxu0 0.0
        %643 = vmatprep.subr.mxu0 0.0
        %644 = vmatpush1.xpose.msra.mxu0 0.0
        %645 = vmatprep.subr.mxu0 0.0
        %646 = vmatpush1.xpose.msra.mxu0 %v613
        %647 = vmatprep.subr.mxu0 0.0
        %648 = vmatpush2.xpose.msra.mxu0 0.0
        %649 = vmatprep.subr.mxu0 0.0
        %650 = vmatpush2.xpose.msra.mxu0 0.0
        %651 = vmatprep.subr.mxu0 0.0
        %652 = vmatpush2.xpose.msra.mxu0 0.0
        %653 = vmatprep.subr.mxu0 0.0
        %654 = vmatpush2.xpose.msra.mxu0 0.0
        %655 = vmatprep.subr.mxu0 0.0
        %656 = vmatpush2.xpose.msra.mxu0 0.0
        %657 = vmatprep.subr.mxu0 0.0
        %658 = vmatpush2.xpose.msra.mxu0 0.0
        %659 = vmatprep.subr.mxu0 0.0
        %660 = vmatpush2.xpose.msra.mxu0 0.0
        %661 = vmatprep.subr.mxu0 0.0
        %662 = vmatpush2.xpose.msra.mxu0 0.0
        %663 = vmatprep.subr.mxu0 0.0
        %664 = vmatpush2.xpose.msra.mxu0 0.0
        %665 = vmatprep.subr.mxu0 0.0
        %666 = vmatpush2.xpose.msra.mxu0 0.0
        %667 = vmatprep.subr.mxu0 0.0
        %668 = vmatpush2.xpose.msra.mxu0 0.0
        %669 = vmatprep.subr.mxu0 0.0
        %670 = vmatpush2.xpose.msra.mxu0 0.0
        %671 = vmatprep.subr.mxu0 0.0
        %672 = vmatpush2.xpose.msra.mxu0 0.0
        %673 = vmatprep.subr.mxu0 0.0
        %674 = vmatpush2.xpose.msra.mxu0 0.0
        %675 = vmatprep.subr.mxu0 0.0
        %676 = vmatpush2.xpose.msra.mxu0 0.0
        %677 = vmatprep.subr.mxu0 0.0
        %678 = vmatpush2.xpose.msra.mxu0 0.0
        %679 = vmatprep.mubr.f32.mxu0 0.0
        %680 = vmatmul.mubr.f32.gmra.mxu0 %v611
        %v681 = vpop.f32.mrf.mxu0
        %v682 = vadd.f32 0.0, %v681
        %v683 = vpop.f32.mrf.mxu0
        %684 = vdwg.mxu0
        %v685 = vmul.f32 %v454, 0.35355338
        %v686 = vmul.f32 %v530, 0.35355338
        %v687 = vmul.f32 %v606, 0.35355338
        %v688 = vmul.f32 %v682, 0.35355338
        %vm689 = vcmp.ne.f32.partialorder %v235, 0.0
        %v690 = vsel %vm689, 1, 0
        %v691 = vlaneseq
        %v692 = vshrl.u32 %v691, 7
        %v693 = vsub.s32 0, %v692
        %v694 = vrot.slane %v690, %v693
        %vm695 = vcmp.eq.s32.totalorder %v694, 1
        %v696 = vsel %vm695, %v685, -1e+09
        %v697 = vsel %vm695, %v686, -1e+09
        %v698 = vsel %vm695, %v687, -1e+09
        %v699 = vsel %vm695, %v688, -1e+09
        %v700 = vsel %vm382, %v696, -inf
        %701 = vmax.xlane.f32.xlu0 %v700
        %v702 = vpop.xlane.xlu0 %701
        %v703 = vsel %vm382, %v697, -inf
        %704 = vmax.xlane.f32.xlu0 %v703
        %v705 = vpop.xlane.xlu0 %704
        %v706 = vsel %vm382, %v698, -inf
        %707 = vmax.xlane.f32.xlu0 %v706
        %v708 = vpop.xlane.xlu0 %707
        %v709 = vsel %vm382, %v699, -inf
        %710 = vmax.xlane.f32.xlu0 %v709
        %v711 = vpop.xlane.xlu0 %710
        %v712 = vsub.f32 %v696, %v702
        %v713 = vsub.f32 %v697, %v705
        %v714 = vsub.f32 %v698, %v708
        %v715 = vsub.f32 %v699, %v711
        %v716 = vmul.f32 %v712, 1.442695
        %v717 = vpow.pop %v716
        %v718 = vmul.f32 %v713, 1.442695
        %v719 = vpow.pop %v718
        %v720 = vmul.f32 %v714, 1.442695
        %v721 = vpow.pop %v720
        %v722 = vmul.f32 %v715, 1.442695
        %v723 = vpow.pop %v722
        %v724 = vsel %vm382, %v717, 0.0
        %725 = vadd.xlane.f32.xlu0 %v724
        %v726 = vpop.xlane.xlu0 %725
        %v727 = vsel %vm382, %v719, 0.0
        %728 = vadd.xlane.f32.xlu0 %v727
        %v729 = vpop.xlane.xlu0 %728
        %v730 = vsel %vm382, %v721, 0.0
        %731 = vadd.xlane.f32.xlu0 %v730
        %v732 = vpop.xlane.xlu0 %731
        %v733 = vsel %vm382, %v723, 0.0
        %734 = vadd.xlane.f32.xlu0 %v733
        %v735 = vpop.xlane.xlu0 %734
        %v736 = vrcp.pop %v726
        %v737 = vrcp.pop %v729
        %v738 = vrcp.pop %v732
        %v739 = vrcp.pop %v735
        %v740 = vmul.f32 %v717, %v736
        %v741 = vmul.f32 %v719, %v737
        %v742 = vmul.f32 %v721, %v738
        %v743 = vmul.f32 %v723, %v739
        %744 = vrot.lane.b32.xlu0 %v370, 64
        %v745 = vpop.permute.xlu0 %744
        %v748 = vsel %vm382, %v740, 0
        %750 = vmatprep.subr.mxu0 0.0
        %751 = vmatpush1.msra.mxu0 0.0
        %752 = vmatprep.subr.mxu0 0.0
        %753 = vmatpush1.msra.mxu0 0.0
        %754 = vmatprep.subr.mxu0 0.0
        %755 = vmatpush1.msra.mxu0 0.0
        %756 = vmatprep.subr.mxu0 0.0
        %757 = vmatpush1.msra.mxu0 0.0
        %758 = vmatprep.subr.mxu0 0.0
        %759 = vmatpush1.msra.mxu0 0.0
        %760 = vmatprep.subr.mxu0 0.0
        %761 = vmatpush1.msra.mxu0 0.0
        %762 = vmatprep.subr.mxu0 0.0
        %763 = vmatpush1.msra.mxu0 0.0
        %764 = vmatprep.subr.mxu0 0.0
        %765 = vmatpush1.msra.mxu0 0.0
        %766 = vmatprep.subr.mxu0 0.0
        %767 = vmatpush1.msra.mxu0 0.0
        %768 = vmatprep.subr.mxu0 0.0
        %769 = vmatpush1.msra.mxu0 0.0
        %770 = vmatprep.subr.mxu0 0.0
        %771 = vmatpush1.msra.mxu0 0.0
        %772 = vmatprep.subr.mxu0 0.0
        %773 = vmatpush1.msra.mxu0 0.0
        %774 = vmatprep.subr.mxu0 0.0
        %775 = vmatpush1.msra.mxu0 0.0
        %776 = vmatprep.subr.mxu0 0.0
        %777 = vmatpush1.msra.mxu0 0.0
        %778 = vmatprep.subr.mxu0 0.0
        %779 = vmatpush1.msra.mxu0 0.0
        %780 = vmatprep.subr.mxu0 0.0
        %781 = vmatpush1.msra.mxu0 %v745
        %782 = vmatprep.subr.mxu0 0.0
        %783 = vmatpush2.msra.mxu0 0.0
        %784 = vmatprep.subr.mxu0 0.0
        %785 = vmatpush2.msra.mxu0 0.0
        %786 = vmatprep.subr.mxu0 0.0
        %787 = vmatpush2.msra.mxu0 0.0
        %788 = vmatprep.subr.mxu0 0.0
        %789 = vmatpush2.msra.mxu0 0.0
        %790 = vmatprep.subr.mxu0 0.0
        %791 = vmatpush2.msra.mxu0 0.0
        %792 = vmatprep.subr.mxu0 0.0
        %793 = vmatpush2.msra.mxu0 0.0
        %794 = vmatprep.subr.mxu0 0.0
        %795 = vmatpush2.msra.mxu0 0.0
        %796 = vmatprep.subr.mxu0 0.0
        %797 = vmatpush2.msra.mxu0 0.0
        %798 = vmatprep.subr.mxu0 0.0
        %799 = vmatpush2.msra.mxu0 0.0
        %800 = vmatprep.subr.mxu0 0.0
        %801 = vmatpush2.msra.mxu0 0.0
        %802 = vmatprep.subr.mxu0 0.0
        %803 = vmatpush2.msra.mxu0 0.0
        %804 = vmatprep.subr.mxu0 0.0
        %805 = vmatpush2.msra.mxu0 0.0
        %806 = vmatprep.subr.mxu0 0.0
        %807 = vmatpush2.msra.mxu0 0.0
        %808 = vmatprep.subr.mxu0 0.0
        %809 = vmatpush2.msra.mxu0 0.0
        %810 = vmatprep.subr.mxu0 0.0
        %811 = vmatpush2.msra.mxu0 0.0
        %812 = vmatprep.subr.mxu0 0.0
        %813 = vmatpush2.msra.mxu0 0.0
        %814 = vmatprep.mubr.f32.mxu0 0.0
        %815 = vmatmul.mubr.f32.gmra.mxu0 %v748
        %v816 = vpop.f32.mrf.mxu0
        %v817 = vadd.f32 0.0, %v816
        %v818 = vpop.f32.mrf.mxu0
        %819 = vdwg.mxu0
        %820 = vrot.lane.b32.xlu0 %v375, 64
        %v821 = vpop.permute.xlu0 %820
        %v824 = vsel %vm382, %v741, 0
        %826 = vmatprep.subr.mxu0 0.0
        %827 = vmatpush1.msra.mxu0 0.0
        %828 = vmatprep.subr.mxu0 0.0
        %829 = vmatpush1.msra.mxu0 0.0
        %830 = vmatprep.subr.mxu0 0.0
        %831 = vmatpush1.msra.mxu0 0.0
        %832 = vmatprep.subr.mxu0 0.0
        %833 = vmatpush1.msra.mxu0 0.0
        %834 = vmatprep.subr.mxu0 0.0
        %835 = vmatpush1.msra.mxu0 0.0
        %836 = vmatprep.subr.mxu0 0.0
        %837 = vmatpush1.msra.mxu0 0.0
        %838 = vmatprep.subr.mxu0 0.0
        %839 = vmatpush1.msra.mxu0 0.0
        %840 = vmatprep.subr.mxu0 0.0
        %841 = vmatpush1.msra.mxu0 0.0
        %842 = vmatprep.subr.mxu0 0.0
        %843 = vmatpush1.msra.mxu0 0.0
        %844 = vmatprep.subr.mxu0 0.0
        %845 = vmatpush1.msra.mxu0 0.0
        %846 = vmatprep.subr.mxu0 0.0
        %847 = vmatpush1.msra.mxu0 0.0
        %848 = vmatprep.subr.mxu0 0.0
        %849 = vmatpush1.msra.mxu0 0.0
        %850 = vmatprep.subr.mxu0 0.0
        %851 = vmatpush1.msra.mxu0 0.0
        %852 = vmatprep.subr.mxu0 0.0
        %853 = vmatpush1.msra.mxu0 0.0
        %854 = vmatprep.subr.mxu0 0.0
        %855 = vmatpush1.msra.mxu0 0.0
        %856 = vmatprep.subr.mxu0 0.0
        %857 = vmatpush1.msra.mxu0 %v821
        %858 = vmatprep.subr.mxu0 0.0
        %859 = vmatpush2.msra.mxu0 0.0
        %860 = vmatprep.subr.mxu0 0.0
        %861 = vmatpush2.msra.mxu0 0.0
        %862 = vmatprep.subr.mxu0 0.0
        %863 = vmatpush2.msra.mxu0 0.0
        %864 = vmatprep.subr.mxu0 0.0
        %865 = vmatpush2.msra.mxu0 0.0
        %866 = vmatprep.subr.mxu0 0.0
        %867 = vmatpush2.msra.mxu0 0.0
        %868 = vmatprep.subr.mxu0 0.0
        %869 = vmatpush2.msra.mxu0 0.0
        %870 = vmatprep.subr.mxu0 0.0
        %871 = vmatpush2.msra.mxu0 0.0
        %872 = vmatprep.subr.mxu0 0.0
        %873 = vmatpush2.msra.mxu0 0.0
        %874 = vmatprep.subr.mxu0 0.0
        %875 = vmatpush2.msra.mxu0 0.0
        %876 = vmatprep.subr.mxu0 0.0
        %877 = vmatpush2.msra.mxu0 0.0
        %878 = vmatprep.subr.mxu0 0.0
        %879 = vmatpush2.msra.mxu0 0.0
        %880 = vmatprep.subr.mxu0 0.0
        %881 = vmatpush2.msra.mxu0 0.0
        %882 = vmatprep.subr.mxu0 0.0
        %883 = vmatpush2.msra.mxu0 0.0
        %884 = vmatprep.subr.mxu0 0.0
        %885 = vmatpush2.msra.mxu0 0.0
        %886 = vmatprep.subr.mxu0 0.0
        %887 = vmatpush2.msra.mxu0 0.0
        %888 = vmatprep.subr.mxu0 0.0
        %889 = vmatpush2.msra.mxu0 0.0
        %890 = vmatprep.mubr.f32.mxu0 0.0
        %891 = vmatmul.mubr.f32.gmra.mxu0 %v824
        %v892 = vpop.f32.mrf.mxu0
        %v893 = vadd.f32 0.0, %v892
        %v894 = vpop.f32.mrf.mxu0
        %895 = vdwg.mxu0
        %896 = vrot.lane.b32.xlu0 %v377, 64
        %v897 = vpop.permute.xlu0 %896
        %v900 = vsel %vm382, %v742, 0
        %902 = vmatprep.subr.mxu0 0.0
        %903 = vmatpush1.msra.mxu0 0.0
        %904 = vmatprep.subr.mxu0 0.0
        %905 = vmatpush1.msra.mxu0 0.0
        %906 = vmatprep.subr.mxu0 0.0
        %907 = vmatpush1.msra.mxu0 0.0
        %908 = vmatprep.subr.mxu0 0.0
        %909 = vmatpush1.msra.mxu0 0.0
        %910 = vmatprep.subr.mxu0 0.0
        %911 = vmatpush1.msra.mxu0 0.0
        %912 = vmatprep.subr.mxu0 0.0
        %913 = vmatpush1.msra.mxu0 0.0
        %914 = vmatprep.subr.mxu0 0.0
        %915 = vmatpush1.msra.mxu0 0.0
        %916 = vmatprep.subr.mxu0 0.0
        %917 = vmatpush1.msra.mxu0 0.0
        %918 = vmatprep.subr.mxu0 0.0
        %919 = vmatpush1.msra.mxu0 0.0
        %920 = vmatprep.subr.mxu0 0.0
        %921 = vmatpush1.msra.mxu0 0.0
        %922 = vmatprep.subr.mxu0 0.0
        %923 = vmatpush1.msra.mxu0 0.0
        %924 = vmatprep.subr.mxu0 0.0
        %925 = vmatpush1.msra.mxu0 0.0
        %926 = vmatprep.subr.mxu0 0.0
        %927 = vmatpush1.msra.mxu0 0.0
        %928 = vmatprep.subr.mxu0 0.0
        %929 = vmatpush1.msra.mxu0 0.0
        %930 = vmatprep.subr.mxu0 0.0
        %931 = vmatpush1.msra.mxu0 0.0
        %932 = vmatprep.subr.mxu0 0.0
        %933 = vmatpush1.msra.mxu0 %v897
        %934 = vmatprep.subr.mxu0 0.0
        %935 = vmatpush2.msra.mxu0 0.0
        %936 = vmatprep.subr.mxu0 0.0
        %937 = vmatpush2.msra.mxu0 0.0
        %938 = vmatprep.subr.mxu0 0.0
        %939 = vmatpush2.msra.mxu0 0.0
        %940 = vmatprep.subr.mxu0 0.0
        %941 = vmatpush2.msra.mxu0 0.0
        %942 = vmatprep.subr.mxu0 0.0
        %943 = vmatpush2.msra.mxu0 0.0
        %944 = vmatprep.subr.mxu0 0.0
        %945 = vmatpush2.msra.mxu0 0.0
        %946 = vmatprep.subr.mxu0 0.0
        %947 = vmatpush2.msra.mxu0 0.0
        %948 = vmatprep.subr.mxu0 0.0
        %949 = vmatpush2.msra.mxu0 0.0
        %950 = vmatprep.subr.mxu0 0.0
        %951 = vmatpush2.msra.mxu0 0.0
        %952 = vmatprep.subr.mxu0 0.0
        %953 = vmatpush2.msra.mxu0 0.0
        %954 = vmatprep.subr.mxu0 0.0
        %955 = vmatpush2.msra.mxu0 0.0
        %956 = vmatprep.subr.mxu0 0.0
        %957 = vmatpush2.msra.mxu0 0.0
        %958 = vmatprep.subr.mxu0 0.0
        %959 = vmatpush2.msra.mxu0 0.0
        %960 = vmatprep.subr.mxu0 0.0
        %961 = vmatpush2.msra.mxu0 0.0
        %962 = vmatprep.subr.mxu0 0.0
        %963 = vmatpush2.msra.mxu0 0.0
        %964 = vmatprep.subr.mxu0 0.0
        %965 = vmatpush2.msra.mxu0 0.0
        %966 = vmatprep.mubr.f32.mxu0 0.0
        %967 = vmatmul.mubr.f32.gmra.mxu0 %v900
        %v968 = vpop.f32.mrf.mxu0
        %v969 = vadd.f32 0.0, %v968
        %v970 = vpop.f32.mrf.mxu0
        %971 = vdwg.mxu0
        %972 = vrot.lane.b32.xlu0 %v379, 64
        %v973 = vpop.permute.xlu0 %972
        %v976 = vsel %vm382, %v743, 0
        %978 = vmatprep.subr.mxu0 0.0
        %979 = vmatpush1.msra.mxu0 0.0
        %980 = vmatprep.subr.mxu0 0.0
        %981 = vmatpush1.msra.mxu0 0.0
        %982 = vmatprep.subr.mxu0 0.0
        %983 = vmatpush1.msra.mxu0 0.0
        %984 = vmatprep.subr.mxu0 0.0
        %985 = vmatpush1.msra.mxu0 0.0
        %986 = vmatprep.subr.mxu0 0.0
        %987 = vmatpush1.msra.mxu0 0.0
        %988 = vmatprep.subr.mxu0 0.0
        %989 = vmatpush1.msra.mxu0 0.0
        %990 = vmatprep.subr.mxu0 0.0
        %991 = vmatpush1.msra.mxu0 0.0
        %992 = vmatprep.subr.mxu0 0.0
        %993 = vmatpush1.msra.mxu0 0.0
        %994 = vmatprep.subr.mxu0 0.0
        %995 = vmatpush1.msra.mxu0 0.0
        %996 = vmatprep.subr.mxu0 0.0
        %997 = vmatpush1.msra.mxu0 0.0
        %998 = vmatprep.subr.mxu0 0.0
        %999 = vmatpush1.msra.mxu0 0.0
        %1000 = vmatprep.subr.mxu0 0.0
        %1001 = vmatpush1.msra.mxu0 0.0
        %1002 = vmatprep.subr.mxu0 0.0
        %1003 = vmatpush1.msra.mxu0 0.0
        %1004 = vmatprep.subr.mxu0 0.0
        %1005 = vmatpush1.msra.mxu0 0.0
        %1006 = vmatprep.subr.mxu0 0.0
        %1007 = vmatpush1.msra.mxu0 0.0
        %1008 = vmatprep.subr.mxu0 0.0
        %1009 = vmatpush1.msra.mxu0 %v973
        %1010 = vmatprep.subr.mxu0 0.0
        %1011 = vmatpush2.msra.mxu0 0.0
        %1012 = vmatprep.subr.mxu0 0.0
        %1013 = vmatpush2.msra.mxu0 0.0
        %1014 = vmatprep.subr.mxu0 0.0
        %1015 = vmatpush2.msra.mxu0 0.0
        %1016 = vmatprep.subr.mxu0 0.0
        %1017 = vmatpush2.msra.mxu0 0.0
        %1018 = vmatprep.subr.mxu0 0.0
        %1019 = vmatpush2.msra.mxu0 0.0
        %1020 = vmatprep.subr.mxu0 0.0
        %1021 = vmatpush2.msra.mxu0 0.0
        %1022 = vmatprep.subr.mxu0 0.0
        %1023 = vmatpush2.msra.mxu0 0.0
        %1024 = vmatprep.subr.mxu0 0.0
        %1025 = vmatpush2.msra.mxu0 0.0
        %1026 = vmatprep.subr.mxu0 0.0
        %1027 = vmatpush2.msra.mxu0 0.0
        %1028 = vmatprep.subr.mxu0 0.0
        %1029 = vmatpush2.msra.mxu0 0.0
        %1030 = vmatprep.subr.mxu0 0.0
        %1031 = vmatpush2.msra.mxu0 0.0
        %1032 = vmatprep.subr.mxu0 0.0
        %1033 = vmatpush2.msra.mxu0 0.0
        %1034 = vmatprep.subr.mxu0 0.0
        %1035 = vmatpush2.msra.mxu0 0.0
        %1036 = vmatprep.subr.mxu0 0.0
        %1037 = vmatpush2.msra.mxu0 0.0
        %1038 = vmatprep.subr.mxu0 0.0
        %1039 = vmatpush2.msra.mxu0 0.0
        %1040 = vmatprep.subr.mxu0 0.0
        %1041 = vmatpush2.msra.mxu0 0.0
        %1042 = vmatprep.mubr.f32.mxu0 0.0
        %1043 = vmatmul.mubr.f32.gmra.mxu0 %v976
        %v1044 = vpop.f32.mrf.mxu0
        %v1045 = vadd.f32 0.0, %v1044
        %v1046 = vpop.f32.mrf.mxu0
        %1047 = vdwg.mxu0
        %v1049 = vsel %vm382, %v817, 0
        %1051 = vmatprep.subr.mxu0 0.0
        %1052 = vmatpush1.msra.mxu0 0.0
        %1053 = vmatprep.subr.mxu0 0.0
        %1054 = vmatpush1.msra.mxu0 0.0
        %1055 = vmatprep.subr.mxu0 0.0
        %1056 = vmatpush1.msra.mxu0 0.0
        %1057 = vmatprep.subr.mxu0 0.0
        %1058 = vmatpush1.msra.mxu0 0.0
        %1059 = vmatprep.subr.mxu0 0.0
        %1060 = vmatpush1.msra.mxu0 0.0
        %1061 = vmatprep.subr.mxu0 0.0
        %1062 = vmatpush1.msra.mxu0 0.0
        %1063 = vmatprep.subr.mxu0 0.0
        %1064 = vmatpush1.msra.mxu0 0.0
        %1065 = vmatprep.subr.mxu0 0.0
        %1066 = vmatpush1.msra.mxu0 0.0
        %1067 = vmatprep.subr.mxu0 0.0
        %1068 = vmatpush1.msra.mxu0 0.0
        %1069 = vmatprep.subr.mxu0 0.0
        %1070 = vmatpush1.msra.mxu0 0.0
        %1071 = vmatprep.subr.mxu0 0.0
        %1072 = vmatpush1.msra.mxu0 0.0
        %1073 = vmatprep.subr.mxu0 0.0
        %1074 = vmatpush1.msra.mxu0 0.0
        %1075 = vmatprep.subr.mxu0 0.0
        %1076 = vmatpush1.msra.mxu0 0.0
        %1077 = vmatprep.subr.mxu0 0.0
        %1078 = vmatpush1.msra.mxu0 0.0
        %1079 = vmatprep.subr.mxu0 0.0
        %1080 = vmatpush1.msra.mxu0 0.0
        %1081 = vmatprep.subr.mxu0 0.0
        %1082 = vmatpush1.msra.mxu0 %v260
        %1083 = vmatprep.subr.mxu0 0.0
        %1084 = vmatpush2.msra.mxu0 0.0
        %1085 = vmatprep.subr.mxu0 0.0
        %1086 = vmatpush2.msra.mxu0 0.0
        %1087 = vmatprep.subr.mxu0 0.0
        %1088 = vmatpush2.msra.mxu0 0.0
        %1089 = vmatprep.subr.mxu0 0.0
        %1090 = vmatpush2.msra.mxu0 0.0
        %1091 = vmatprep.subr.mxu0 0.0
        %1092 = vmatpush2.msra.mxu0 0.0
        %1093 = vmatprep.subr.mxu0 0.0
        %1094 = vmatpush2.msra.mxu0 0.0
        %1095 = vmatprep.subr.mxu0 0.0
        %1096 = vmatpush2.msra.mxu0 0.0
        %1097 = vmatprep.subr.mxu0 0.0
        %1098 = vmatpush2.msra.mxu0 0.0
        %1099 = vmatprep.subr.mxu0 0.0
        %1100 = vmatpush2.msra.mxu0 0.0
        %1101 = vmatprep.subr.mxu0 0.0
        %1102 = vmatpush2.msra.mxu0 0.0
        %1103 = vmatprep.subr.mxu0 0.0
        %1104 = vmatpush2.msra.mxu0 0.0
        %1105 = vmatprep.subr.mxu0 0.0
        %1106 = vmatpush2.msra.mxu0 0.0
        %1107 = vmatprep.subr.mxu0 0.0
        %1108 = vmatpush2.msra.mxu0 0.0
        %1109 = vmatprep.subr.mxu0 0.0
        %1110 = vmatpush2.msra.mxu0 0.0
        %1111 = vmatprep.subr.mxu0 0.0
        %1112 = vmatpush2.msra.mxu0 0.0
        %1113 = vmatprep.subr.mxu0 0.0
        %1114 = vmatpush2.msra.mxu0 0.0
        %1115 = vmatprep.mubr.f32.mxu0 0.0
        %1116 = vmatmul.mubr.f32.gmra.mxu0 %v1049
        %v1117 = vpop.f32.mrf.mxu0
        %v1118 = vadd.f32 0.0, %v1117
        %v1119 = vpop.f32.mrf.mxu0
        %1120 = vdwg.mxu0
        %v1122 = vsel %vm382, %v893, 0
        %1124 = vmatprep.subr.mxu0 0.0
        %1125 = vmatpush1.msra.mxu0 0.0
        %1126 = vmatprep.subr.mxu0 0.0
        %1127 = vmatpush1.msra.mxu0 0.0
        %1128 = vmatprep.subr.mxu0 0.0
        %1129 = vmatpush1.msra.mxu0 0.0
        %1130 = vmatprep.subr.mxu0 0.0
        %1131 = vmatpush1.msra.mxu0 0.0
        %1132 = vmatprep.subr.mxu0 0.0
        %1133 = vmatpush1.msra.mxu0 0.0
        %1134 = vmatprep.subr.mxu0 0.0
        %1135 = vmatpush1.msra.mxu0 0.0
        %1136 = vmatprep.subr.mxu0 0.0
        %1137 = vmatpush1.msra.mxu0 0.0
        %1138 = vmatprep.subr.mxu0 0.0
        %1139 = vmatpush1.msra.mxu0 0.0
        %1140 = vmatprep.subr.mxu0 0.0
        %1141 = vmatpush1.msra.mxu0 0.0
        %1142 = vmatprep.subr.mxu0 0.0
        %1143 = vmatpush1.msra.mxu0 0.0
        %1144 = vmatprep.subr.mxu0 0.0
        %1145 = vmatpush1.msra.mxu0 0.0
        %1146 = vmatprep.subr.mxu0 0.0
        %1147 = vmatpush1.msra.mxu0 0.0
        %1148 = vmatprep.subr.mxu0 0.0
        %1149 = vmatpush1.msra.mxu0 0.0
        %1150 = vmatprep.subr.mxu0 0.0
        %1151 = vmatpush1.msra.mxu0 0.0
        %1152 = vmatprep.subr.mxu0 0.0
        %1153 = vmatpush1.msra.mxu0 0.0
        %1154 = vmatprep.subr.mxu0 0.0
        %1155 = vmatpush1.msra.mxu0 %v261
        %1156 = vmatprep.subr.mxu0 0.0
        %1157 = vmatpush2.msra.mxu0 0.0
        %1158 = vmatprep.subr.mxu0 0.0
        %1159 = vmatpush2.msra.mxu0 0.0
        %1160 = vmatprep.subr.mxu0 0.0
        %1161 = vmatpush2.msra.mxu0 0.0
        %1162 = vmatprep.subr.mxu0 0.0
        %1163 = vmatpush2.msra.mxu0 0.0
        %1164 = vmatprep.subr.mxu0 0.0
        %1165 = vmatpush2.msra.mxu0 0.0
        %1166 = vmatprep.subr.mxu0 0.0
        %1167 = vmatpush2.msra.mxu0 0.0
        %1168 = vmatprep.subr.mxu0 0.0
        %1169 = vmatpush2.msra.mxu0 0.0
        %1170 = vmatprep.subr.mxu0 0.0
        %1171 = vmatpush2.msra.mxu0 0.0
        %1172 = vmatprep.subr.mxu0 0.0
        %1173 = vmatpush2.msra.mxu0 0.0
        %1174 = vmatprep.subr.mxu0 0.0
        %1175 = vmatpush2.msra.mxu0 0.0
        %1176 = vmatprep.subr.mxu0 0.0
        %1177 = vmatpush2.msra.mxu0 0.0
        %1178 = vmatprep.subr.mxu0 0.0
        %1179 = vmatpush2.msra.mxu0 0.0
        %1180 = vmatprep.subr.mxu0 0.0
        %1181 = vmatpush2.msra.mxu0 0.0
        %1182 = vmatprep.subr.mxu0 0.0
        %1183 = vmatpush2.msra.mxu0 0.0
        %1184 = vmatprep.subr.mxu0 0.0
        %1185 = vmatpush2.msra.mxu0 0.0
        %1186 = vmatprep.subr.mxu0 0.0
        %1187 = vmatpush2.msra.mxu0 0.0
        %1188 = vmatprep.mubr.f32.mxu0 0.0
        %1189 = vmatmul.mubr.f32.gmra.mxu0 %v1122
        %v1190 = vpop.f32.mrf.mxu0
        %v1191 = vadd.f32 0.0, %v1190
        %v1192 = vpop.f32.mrf.mxu0
        %1193 = vdwg.mxu0
        %v1195 = vsel %vm382, %v969, 0
        %1197 = vmatprep.subr.mxu0 0.0
        %1198 = vmatpush1.msra.mxu0 0.0
        %1199 = vmatprep.subr.mxu0 0.0
        %1200 = vmatpush1.msra.mxu0 0.0
        %1201 = vmatprep.subr.mxu0 0.0
        %1202 = vmatpush1.msra.mxu0 0.0
        %1203 = vmatprep.subr.mxu0 0.0
        %1204 = vmatpush1.msra.mxu0 0.0
        %1205 = vmatprep.subr.mxu0 0.0
        %1206 = vmatpush1.msra.mxu0 0.0
        %1207 = vmatprep.subr.mxu0 0.0
        %1208 = vmatpush1.msra.mxu0 0.0
        %1209 = vmatprep.subr.mxu0 0.0
        %1210 = vmatpush1.msra.mxu0 0.0
        %1211 = vmatprep.subr.mxu0 0.0
        %1212 = vmatpush1.msra.mxu0 0.0
        %1213 = vmatprep.subr.mxu0 0.0
        %1214 = vmatpush1.msra.mxu0 0.0
        %1215 = vmatprep.subr.mxu0 0.0
        %1216 = vmatpush1.msra.mxu0 0.0
        %1217 = vmatprep.subr.mxu0 0.0
        %1218 = vmatpush1.msra.mxu0 0.0
        %1219 = vmatprep.subr.mxu0 0.0
        %1220 = vmatpush1.msra.mxu0 0.0
        %1221 = vmatprep.subr.mxu0 0.0
        %1222 = vmatpush1.msra.mxu0 0.0
        %1223 = vmatprep.subr.mxu0 0.0
        %1224 = vmatpush1.msra.mxu0 0.0
        %1225 = vmatprep.subr.mxu0 0.0
        %1226 = vmatpush1.msra.mxu0 0.0
        %1227 = vmatprep.subr.mxu0 0.0
        %1228 = vmatpush1.msra.mxu0 %v262
        %1229 = vmatprep.subr.mxu0 0.0
        %1230 = vmatpush2.msra.mxu0 0.0
        %1231 = vmatprep.subr.mxu0 0.0
        %1232 = vmatpush2.msra.mxu0 0.0
        %1233 = vmatprep.subr.mxu0 0.0
        %1234 = vmatpush2.msra.mxu0 0.0
        %1235 = vmatprep.subr.mxu0 0.0
        %1236 = vmatpush2.msra.mxu0 0.0
        %1237 = vmatprep.subr.mxu0 0.0
        %1238 = vmatpush2.msra.mxu0 0.0
        %1239 = vmatprep.subr.mxu0 0.0
        %1240 = vmatpush2.msra.mxu0 0.0
        %1241 = vmatprep.subr.mxu0 0.0
        %1242 = vmatpush2.msra.mxu0 0.0
        %1243 = vmatprep.subr.mxu0 0.0
        %1244 = vmatpush2.msra.mxu0 0.0
        %1245 = vmatprep.subr.mxu0 0.0
        %1246 = vmatpush2.msra.mxu0 0.0
        %1247 = vmatprep.subr.mxu0 0.0
        %1248 = vmatpush2.msra.mxu0 0.0
        %1249 = vmatprep.subr.mxu0 0.0
        %1250 = vmatpush2.msra.mxu0 0.0
        %1251 = vmatprep.subr.mxu0 0.0
        %1252 = vmatpush2.msra.mxu0 0.0
        %1253 = vmatprep.subr.mxu0 0.0
        %1254 = vmatpush2.msra.mxu0 0.0
        %1255 = vmatprep.subr.mxu0 0.0
        %1256 = vmatpush2.msra.mxu0 0.0
        %1257 = vmatprep.subr.mxu0 0.0
        %1258 = vmatpush2.msra.mxu0 0.0
        %1259 = vmatprep.subr.mxu0 0.0
        %1260 = vmatpush2.msra.mxu0 0.0
        %1261 = vmatprep.mubr.f32.mxu0 0.0
        %1262 = vmatmul.mubr.f32.gmra.mxu0 %v1195
        %v1263 = vpop.f32.mrf.mxu0
        %v1264 = vadd.f32 0.0, %v1263
        %v1265 = vpop.f32.mrf.mxu0
        %1266 = vdwg.mxu0
        %v1268 = vsel %vm382, %v1045, 0
        %1270 = vmatprep.subr.mxu0 0.0
        %1271 = vmatpush1.msra.mxu0 0.0
        %1272 = vmatprep.subr.mxu0 0.0
        %1273 = vmatpush1.msra.mxu0 0.0
        %1274 = vmatprep.subr.mxu0 0.0
        %1275 = vmatpush1.msra.mxu0 0.0
        %1276 = vmatprep.subr.mxu0 0.0
        %1277 = vmatpush1.msra.mxu0 0.0
        %1278 = vmatprep.subr.mxu0 0.0
        %1279 = vmatpush1.msra.mxu0 0.0
        %1280 = vmatprep.subr.mxu0 0.0
        %1281 = vmatpush1.msra.mxu0 0.0
        %1282 = vmatprep.subr.mxu0 0.0
        %1283 = vmatpush1.msra.mxu0 0.0
        %1284 = vmatprep.subr.mxu0 0.0
        %1285 = vmatpush1.msra.mxu0 0.0
        %1286 = vmatprep.subr.mxu0 0.0
        %1287 = vmatpush1.msra.mxu0 0.0
        %1288 = vmatprep.subr.mxu0 0.0
        %1289 = vmatpush1.msra.mxu0 0.0
        %1290 = vmatprep.subr.mxu0 0.0
        %1291 = vmatpush1.msra.mxu0 0.0
        %1292 = vmatprep.subr.mxu0 0.0
        %1293 = vmatpush1.msra.mxu0 0.0
        %1294 = vmatprep.subr.mxu0 0.0
        %1295 = vmatpush1.msra.mxu0 0.0
        %1296 = vmatprep.subr.mxu0 0.0
        %1297 = vmatpush1.msra.mxu0 0.0
        %1298 = vmatprep.subr.mxu0 0.0
        %1299 = vmatpush1.msra.mxu0 0.0
        %1300 = vmatprep.subr.mxu0 0.0
        %1301 = vmatpush1.msra.mxu0 %v263
        %1302 = vmatprep.subr.mxu0 0.0
        %1303 = vmatpush2.msra.mxu0 0.0
        %1304 = vmatprep.subr.mxu0 0.0
        %1305 = vmatpush2.msra.mxu0 0.0
        %1306 = vmatprep.subr.mxu0 0.0
        %1307 = vmatpush2.msra.mxu0 0.0
        %1308 = vmatprep.subr.mxu0 0.0
        %1309 = vmatpush2.msra.mxu0 0.0
        %1310 = vmatprep.subr.mxu0 0.0
        %1311 = vmatpush2.msra.mxu0 0.0
        %1312 = vmatprep.subr.mxu0 0.0
        %1313 = vmatpush2.msra.mxu0 0.0
        %1314 = vmatprep.subr.mxu0 0.0
        %1315 = vmatpush2.msra.mxu0 0.0
        %1316 = vmatprep.subr.mxu0 0.0
        %1317 = vmatpush2.msra.mxu0 0.0
        %1318 = vmatprep.subr.mxu0 0.0
        %1319 = vmatpush2.msra.mxu0 0.0
        %1320 = vmatprep.subr.mxu0 0.0
        %1321 = vmatpush2.msra.mxu0 0.0
        %1322 = vmatprep.subr.mxu0 0.0
        %1323 = vmatpush2.msra.mxu0 0.0
        %1324 = vmatprep.subr.mxu0 0.0
        %1325 = vmatpush2.msra.mxu0 0.0
        %1326 = vmatprep.subr.mxu0 0.0
        %1327 = vmatpush2.msra.mxu0 0.0
        %1328 = vmatprep.subr.mxu0 0.0
        %1329 = vmatpush2.msra.mxu0 0.0
        %1330 = vmatprep.subr.mxu0 0.0
        %1331 = vmatpush2.msra.mxu0 0.0
        %1332 = vmatprep.subr.mxu0 0.0
        %1333 = vmatpush2.msra.mxu0 0.0
        %1334 = vmatprep.mubr.f32.mxu0 0.0
        %1335 = vmatmul.mubr.f32.gmra.mxu0 %v1268
        %v1336 = vpop.f32.mrf.mxu0
        %v1337 = vadd.f32 0.0, %v1336
        %v1338 = vpop.f32.mrf.mxu0
        %1339 = vdwg.mxu0
        %v1340 = vsel %vm264, %v1118, 0.0
        %v1341 = vsel %vm264, %v1191, 0.0
        %v1342 = vadd.f32 %v1340, %v1341
        %v1343 = vsel %vm264, %v1264, 0.0
        %v1344 = vadd.f32 %v1342, %v1343
        %v1345 = vsel %vm264, %v1337, 0.0
        %v1346 = vadd.f32 %v1344, %v1345
        %v1347 = vadd.f32 %v234, %v1346
        %v1348 = vlaneseq
        %v1349 = vshrl.u32 %v1348, 7
        %v1350 = vsub.s32 0, %v1349
        %v1351 = vrot.slane %v254, %v1350
        %v1352 = vadd.f32 %v1347, %v1351
        %v1353 = vsel %vm264, %v1352, 0.0
        %1354 = vadd.xlane.f32.xlu0 %v1353
        %v1355 = vpop.xlane.xlu0 %1354
        %v1356 = vmul.f32 %v1355, %v268
        %v1357 = vsub.f32 %v1352, %v1356
        %v1358 = vmul.f32 %v1357, %v1357
        %v1359 = vsel %vm264, %v1358, 0.0
        %1360 = vadd.xlane.f32.xlu0 %v1359
        %v1361 = vpop.xlane.xlu0 %1360
        %v1362 = vmul.f32 %v1361, 0.032258064
        %v1363 = vlaneseq
        %v1364 = vshrl.u32 %v1363, 7
        %v1365 = vsub.s32 0, %v1364
        %v1366 = vrot.slane %v258, %v1365
        %v1367 = vmul.f32 %v1366, %v1357
        %v1368 = vrsqrt.pop %v1362
        %v1369 = vmul.f32 %v1362, %v1368
        %vm1370 = vcmp.eq.f32.partialorder %v1362, inf
        %v1371 = vsel %vm1370, %v1362, %v1369
        %vm1372 = vcmp.eq.f32.partialorder %v1362, 0.0
        %v1373 = vand.u32 %v1362, 2147483648
        %v1374 = vsel %vm1372, %v1373, %v1371
        %v1375 = vadd.f32 %v1374, 1e-06
        %v1376 = vrcp.pop %v1375
        %v1377 = vmul.f32 %v1367, %v1376
        %v1378 = vlaneseq
        %v1379 = vshrl.u32 %v1378, 7
        %v1380 = vsub.s32 0, %v1379
        %v1381 = vrot.slane %v259, %v1380
        %v1382 = vadd.f32 %v1377, %v1381
        %v1383 = vlaneseq
        %v1384 = vshrl.u32 %v1383, 7
        %v1385 = vsub.s32 0, %v1384
        %v1386 = vrot.slane %v245, %v1385
        %v1388 = vsel %vm264, %v1382, 0
        %1390 = vmatprep.subr.mxu0 0.0
        %1391 = vmatpush1.msra.mxu0 0.0
        %1392 = vmatprep.subr.mxu0 0.0
        %1393 = vmatpush1.msra.mxu0 0.0
        %1394 = vmatprep.subr.mxu0 0.0
        %1395 = vmatpush1.msra.mxu0 0.0
        %1396 = vmatprep.subr.mxu0 0.0
        %1397 = vmatpush1.msra.mxu0 0.0
        %1398 = vmatprep.subr.mxu0 0.0
        %1399 = vmatpush1.msra.mxu0 0.0
        %1400 = vmatprep.subr.mxu0 0.0
        %1401 = vmatpush1.msra.mxu0 0.0
        %1402 = vmatprep.subr.mxu0 0.0
        %1403 = vmatpush1.msra.mxu0 0.0
        %1404 = vmatprep.subr.mxu0 0.0
        %1405 = vmatpush1.msra.mxu0 0.0
        %1406 = vmatprep.subr.mxu0 0.0
        %1407 = vmatpush1.msra.mxu0 0.0
        %1408 = vmatprep.subr.mxu0 0.0
        %1409 = vmatpush1.msra.mxu0 0.0
        %1410 = vmatprep.subr.mxu0 0.0
        %1411 = vmatpush1.msra.mxu0 0.0
        %1412 = vmatprep.subr.mxu0 0.0
        %1413 = vmatpush1.msra.mxu0 0.0
        %1414 = vmatprep.subr.mxu0 0.0
        %1415 = vmatpush1.msra.mxu0 %v244
        %1416 = vmatprep.subr.mxu0 0.0
        %1417 = vmatpush1.msra.mxu0 %v243
        %1418 = vmatprep.subr.mxu0 0.0
        %1419 = vmatpush1.msra.mxu0 %v242
        %1420 = vmatprep.subr.mxu0 0.0
        %1421 = vmatpush1.msra.mxu0 %v241
        %1422 = vmatprep.subr.mxu0 0.0
        %1423 = vmatpush2.msra.mxu0 0.0
        %1424 = vmatprep.subr.mxu0 0.0
        %1425 = vmatpush2.msra.mxu0 0.0
        %1426 = vmatprep.subr.mxu0 0.0
        %1427 = vmatpush2.msra.mxu0 0.0
        %1428 = vmatprep.subr.mxu0 0.0
        %1429 = vmatpush2.msra.mxu0 0.0
        %1430 = vmatprep.subr.mxu0 0.0
        %1431 = vmatpush2.msra.mxu0 0.0
        %1432 = vmatprep.subr.mxu0 0.0
        %1433 = vmatpush2.msra.mxu0 0.0
        %1434 = vmatprep.subr.mxu0 0.0
        %1435 = vmatpush2.msra.mxu0 0.0
        %1436 = vmatprep.subr.mxu0 0.0
        %1437 = vmatpush2.msra.mxu0 0.0
        %1438 = vmatprep.subr.mxu0 0.0
        %1439 = vmatpush2.msra.mxu0 0.0
        %1440 = vmatprep.subr.mxu0 0.0
        %1441 = vmatpush2.msra.mxu0 0.0
        %1442 = vmatprep.subr.mxu0 0.0
        %1443 = vmatpush2.msra.mxu0 0.0
        %1444 = vmatprep.subr.mxu0 0.0
        %1445 = vmatpush2.msra.mxu0 0.0
        %1446 = vmatprep.subr.mxu0 0.0
        %1447 = vmatpush2.msra.mxu0 0.0
        %1448 = vmatprep.subr.mxu0 0.0
        %1449 = vmatpush2.msra.mxu0 0.0
        %1450 = vmatprep.subr.mxu0 0.0
        %1451 = vmatpush2.msra.mxu0 0.0
        %1452 = vmatprep.subr.mxu0 0.0
        %1453 = vmatpush2.msra.mxu0 0.0
        %1454 = vmatprep.mubr.f32.mxu0 0.0
        %1455 = vmatmul.mubr.f32.gmra.mxu0 %v1388
        %v1456 = vpop.f32.mrf.mxu0
        %v1457 = vadd.f32 %v1386, %v1456
        %v1458 = vpop.f32.mrf.mxu0
        %1459 = vdwg.mxu0
        %v1460 = vmax.f32 %v1457, 0.0
        %vm1461 = vcmask 523264
        %v1463 = vsel %vm1461, %v1460, 0
        %1465 = vmatprep.subr.mxu0 0.0
        %1466 = vmatpush1.msra.mxu0 0.0
        %1467 = vmatprep.subr.mxu0 0.0
        %1468 = vmatpush1.msra.mxu0 0.0
        %1469 = vmatprep.subr.mxu0 0.0
        %1470 = vmatpush1.msra.mxu0 0.0
        %1471 = vmatprep.subr.mxu0 0.0
        %1472 = vmatpush1.msra.mxu0 0.0
        %1473 = vmatprep.subr.mxu0 0.0
        %1474 = vmatpush1.msra.mxu0 0.0
        %1475 = vmatprep.subr.mxu0 0.0
        %1476 = vmatpush1.msra.mxu0 0.0
        %1477 = vmatprep.subr.mxu0 0.0
        %1478 = vmatpush1.msra.mxu0 0.0
        %1479 = vmatprep.subr.mxu0 0.0
        %1480 = vmatpush1.msra.mxu0 0.0
        %1481 = vmatprep.subr.mxu0 0.0
        %1482 = vmatpush1.msra.mxu0 %v253
        %1483 = vmatprep.subr.mxu0 0.0
        %1484 = vmatpush1.msra.mxu0 %v252
        %1485 = vmatprep.subr.mxu0 0.0
        %1486 = vmatpush1.msra.mxu0 %v251
        %1487 = vmatprep.subr.mxu0 0.0
        %1488 = vmatpush1.msra.mxu0 %v250
        %1489 = vmatprep.subr.mxu0 0.0
        %1490 = vmatpush1.msra.mxu0 %v249
        %1491 = vmatprep.subr.mxu0 0.0
        %1492 = vmatpush1.msra.mxu0 %v248
        %1493 = vmatprep.subr.mxu0 0.0
        %1494 = vmatpush1.msra.mxu0 %v247
        %1495 = vmatprep.subr.mxu0 0.0
        %1496 = vmatpush1.msra.mxu0 %v246
        %1497 = vmatprep.subr.mxu0 0.0
        %1498 = vmatpush2.msra.mxu0 0.0
        %1499 = vmatprep.subr.mxu0 0.0
        %1500 = vmatpush2.msra.mxu0 0.0
        %1501 = vmatprep.subr.mxu0 0.0
        %1502 = vmatpush2.msra.mxu0 0.0
        %1503 = vmatprep.subr.mxu0 0.0
        %1504 = vmatpush2.msra.mxu0 0.0
        %1505 = vmatprep.subr.mxu0 0.0
        %1506 = vmatpush2.msra.mxu0 0.0
        %1507 = vmatprep.subr.mxu0 0.0
        %1508 = vmatpush2.msra.mxu0 0.0
        %1509 = vmatprep.subr.mxu0 0.0
        %1510 = vmatpush2.msra.mxu0 0.0
        %1511 = vmatprep.subr.mxu0 0.0
        %1512 = vmatpush2.msra.mxu0 0.0
        %1513 = vmatprep.subr.mxu0 0.0
        %1514 = vmatpush2.msra.mxu0 0.0
        %1515 = vmatprep.subr.mxu0 0.0
        %1516 = vmatpush2.msra.mxu0 0.0
        %1517 = vmatprep.subr.mxu0 0.0
        %1518 = vmatpush2.msra.mxu0 0.0
        %1519 = vmatprep.subr.mxu0 0.0
        %1520 = vmatpush2.msra.mxu0 0.0
        %1521 = vmatprep.subr.mxu0 0.0
        %1522 = vmatpush2.msra.mxu0 0.0
        %1523 = vmatprep.subr.mxu0 0.0
        %1524 = vmatpush2.msra.mxu0 0.0
        %1525 = vmatprep.subr.mxu0 0.0
        %1526 = vmatpush2.msra.mxu0 0.0
        %1527 = vmatprep.subr.mxu0 0.0
        %1528 = vmatpush2.msra.mxu0 0.0
        %1529 = vmatprep.mubr.f32.mxu0 0.0
        %1530 = vmatmul.mubr.f32.gmra.mxu0 %v1463
        %v1531 = vpop.f32.mrf.mxu0
        %v1532 = vadd.f32 0.0, %v1531
        %v1533 = vpop.f32.mrf.mxu0
        %1534 = vdwg.mxu0
        %v1535 = vadd.f32 %v1352, %v1532
        %v1536 = vlaneseq
        %v1537 = vshrl.u32 %v1536, 7
        %v1538 = vsub.s32 0, %v1537
        %v1539 = vrot.slane %v255, %v1538
        %v1540 = vadd.f32 %v1535, %v1539
        %1541 = vst.msk [vmem:[%s226] sm:$0xff] %vm264, %v1540
        %s1542 = sand.u32 %s142, 1
        %s1543 = scalar_lea.sflag [#allocation3], %s1542
        %s1544 = sand.u32 %s142, 1
        %s1545 = smul.addr %s1544, 8
        %s1546 = scalar_lea.vmem [#allocation2], %s1545
        // Predicated region
        $region41: #{tpu_custom_call.1} parent=39 // pred_check
          %p1547 = pneg %p152
        $region42: #{tpu_custom_call.1} parent=39 // pred_check_branch
          %1549 = sbr.rel (%p1547) target = $region44
        $region43: #{tpu_custom_call.1} parent=39 // pred_region
          %s1551 = ssub.s32 128, 128
          %1552 = vsyncadd %s1543, %s1551
          %s1553 = smul.addr %s19, 128
          %s1554 = scalar_lea.hbm %s5, %s1553
          %s1556 = sshll.u32 %s1546, 4
          %s1557 = int_to_ptr.vmem [resolvable:$true] %s1556
          %1559 = dma.vmem_to_hbm [thread:$0]  %s1557, 128, %s1554, %s1543
        $region44: #{tpu_custom_call.1} parent=39 // pred_fallthru
          _
      $region40: #{tpu_custom_call.1} parent=5 // pred_fallthru
        _
      %p1560 = scmp.le.s32.totalorder 2, %s14
      // Predicated region
      $region45: #{tpu_custom_call.1} parent=5 // pred_check
        %p1561 = pneg %p1560
      $region46: #{tpu_custom_call.1} parent=5 // pred_check_branch
        %1563 = sbr.rel (%p1561) target = $region48
      $region47: #{tpu_custom_call.1} parent=5 // pred_region
        %s1564 = ssub.s32 %s14, 2
        // Predicated region
        $region49: #{tpu_custom_call.1} parent=47 // pred_check
          %p1565 = pneg %p158
        $region50: #{tpu_custom_call.1} parent=47 // pred_check_branch
          %1567 = sbr.rel (%p1565) target = $region52
        $region51: #{tpu_custom_call.1} parent=47 // pred_region
          %s1568 = sand.u32 %s143, 1
          %s1569 = scalar_lea.sflag [#allocation3], %s1568
          %s1570 = sand.u32 %s143, 1
          %s1571 = smul.addr %s1570, 8
          %s1572 = scalar_lea.vmem [#allocation2], %s1571
          %1573 = dma.done %s1569, 128
        $region52: #{tpu_custom_call.1} parent=47 // pred_fallthru
          _
      $region48: #{tpu_custom_call.1} parent=5 // pred_fallthru
        _
    $region6: #{tpu_custom_call.1} parent=1 // loop_footer
      %s18 = sadd.s32 1, %s14
    $region7: #{tpu_custom_call.1} parent=1 // loop_footer_branch
      %13 = sbr.rel target = $region3
    $region8: #{tpu_custom_call.1} parent=1 // loop_exit
      _
    %1574 = vsyncpa [#allocation3], 1
    %s1575 = scalar_lea.sflag [#allocation3], 1
    %1576 = vsyncpa %s1575, 1

</llo_original>
